<compile_context>
chip_gen: v6e
topology: v6e:2x2x1
jax: 0.10.0
libtpu: 0.0.40
codegen_flags: <defaults>
</compile_context>

<pallas_src>
import functools

import jax
import jax.numpy as jnp
from jax.experimental import pallas as pl
from jax.experimental.pallas import tpu as pltpu


def _round_up(x, m):
    return (x + m - 1) // m * m


def fsmn_kernel(x_ref,
                w_in1_ref, b_in1_ref, w_in2_ref, b_in2_ref,
                lin_w_ref, conv_w_ref, aff_w_ref, aff_b_ref, cache_ref,
                w_out1_ref, b_out1_ref, w_out2_ref, b_out2_ref,
                y_ref, cache_out_ref,
                *, n_layers, lorder, lstride, t_len, bblk, tc, tc_pad, d_out):
    f32 = jnp.float32
    bf16 = jnp.bfloat16
    m_rows = bblk * t_len

    # Fold batch into the matmul M dimension (T is a multiple of 8 -> free reshape).
    x = x_ref[...].reshape(m_rows, -1).astype(bf16)                    # (M, D_in_p)

    # in_linear1 / in_linear2 (AffineTransform) + ReLU, bf16 MXU / f32 accumulate.
    h = jnp.dot(x, w_in1_ref[...], preferred_element_type=f32) + b_in1_ref[...]
    h = jnp.dot(h.astype(bf16), w_in2_ref[...],
                preferred_element_type=f32) + b_in2_ref[...]
    h = jnp.maximum(h, 0.0)                                            # (M, Dl_p)

    off = tc_pad - tc
    for l in range(n_layers):
        # LinearTransform (no bias)
        p = jnp.dot(h.astype(bf16), lin_w_ref[l],
                    preferred_element_type=f32)                        # (M, P_p)
        p3 = p.reshape(bblk, t_len, -1)                                # (bblk, T, P_p)

        # --- FSMNBlock ---
        cache_l = cache_ref[:, l * tc_pad:(l + 1) * tc_pad, :]         # (bblk, Tc_pad, P_p)
        ybuf = jnp.concatenate([cache_l, p3], axis=1)                  # aligned concat
        # new cache = last Tc frames of cat(cache, p); write the full padded
        # slab (last Tc rows are the real cache, pad rows are never read).
        cache_out_ref[:, l * tc_pad:(l + 1) * tc_pad, :] = (
            ybuf[:, t_len:t_len + tc_pad, :].astype(cache_out_ref.dtype))
        # causal depthwise conv (conv_left) + residual
        cw = conv_w_ref[l]                                             # (lorder, P_p)
        conv = jnp.zeros_like(p3)
        for k in range(lorder):
            s = off + k * lstride
            conv = conv + ybuf[:, s:s + t_len, :] * cw[k:k + 1, :]
        p = (p3 + conv).reshape(m_rows, -1)

        # AffineTransform + ReLU
        h = jnp.maximum(
            jnp.dot(p.astype(bf16), aff_w_ref[l],
                    preferred_element_type=f32) + aff_b_ref[l], 0.0)

    # out_linear1 / out_linear2 + softmax over the (unpadded) last dim.
    o = jnp.dot(h.astype(bf16), w_out1_ref[...],
                preferred_element_type=f32) + b_out1_ref[...]
    o = jnp.dot(o.astype(bf16), w_out2_ref[...],
                preferred_element_type=f32) + b_out2_ref[...]
    lane = jax.lax.broadcasted_iota(jnp.int32, o.shape, 1)
    o = jnp.where(lane < d_out, o, -1e30)                              # mask pad lanes
    mx = jnp.max(o, axis=-1, keepdims=True)
    e = jnp.exp(o - mx)
    denom = jnp.sum(e, axis=-1, keepdims=True)
    o = e * pl.reciprocal(denom, approx=False)                         # EUP, not VPU div
    y_ref[...] = o.reshape(bblk, t_len, -1).astype(y_ref.dtype)


def fsmn_export_forward(x, params, caches, *, lorder, lstride, bblk=None):
    """x: (B, T, D_in) f32; caches: (B, L, Tc, P) f32 (batch-major).
    Returns (softmax probs (B, T, D_out), new caches (B, L, Tc, P))."""
    f32, bf16 = jnp.float32, jnp.bfloat16
    B, T, D_in = x.shape
    Bc, L, Tc, P = caches.shape
    assert Bc == B
    D1 = params["w_in1"].shape[1]
    Dl = params["w_in2"].shape[1]
    D2 = params["w_out1"].shape[1]
    D_out = params["w_out2"].shape[1]

    LANE = 128
    Dinp, D1p, Dlp, Pp, D2p, Doutp = (
        _round_up(d, LANE) for d in (D_in, D1, Dl, P, D2, D_out))
    tc_pad = _round_up(max(Tc, 1), 8)

    if bblk is None:                       # target ~256 matmul rows per grid step
        bblk = max(1, min(B, 256 // max(T, 1)))
    B_pad = _round_up(B, bblk)
    grid = (B_pad // bblk,)

    def padw(a, shape, dtype):
        return jnp.pad(a, [(0, s - d) for d, s in zip(a.shape, shape)]).astype(dtype)

    # Matmul weights in bf16 (MXU operands); biases / conv taps stay f32.
    w_in1 = padw(params["w_in1"], (Dinp, D1p), bf16)
    b_in1 = padw(params["b_in1"], (1, D1p), f32)
    w_in2 = padw(params["w_in2"], (D1p, Dlp), bf16)
    b_in2 = padw(params["b_in2"], (1, Dlp), f32)
    lin_w = padw(params["lin_w"], (L, Dlp, Pp), bf16)
    conv_w = padw(params["conv_w"], (L, lorder, Pp), f32)
    aff_w = padw(params["aff_w"], (L, Pp, Dlp), bf16)
    aff_b = padw(params["aff_b"], (L, 1, Dlp), f32)
    w_out1 = padw(params["w_out1"], (Dlp, D2p), bf16)
    b_out1 = padw(params["b_out1"], (1, D2p), f32)
    w_out2 = padw(params["w_out2"], (D2p, Doutp), bf16)
    b_out2 = padw(params["b_out2"], (1, Doutp), f32)

    # Lane-padded input / batch-major, sublane-padded, flattened cache slab.
    x_p = jnp.zeros((B_pad, T, Dinp), f32).at[:B, :, :D_in].set(x.astype(f32))
    cache_p = jnp.zeros((B_pad, L, tc_pad, Pp), f32)
    if Tc > 0:
        cache_p = cache_p.at[:B, :, tc_pad - Tc:, :P].set(caches.astype(f32))
    cache_flat = cache_p.reshape(B_pad, L * tc_pad, Pp)

    kernel = functools.partial(
        fsmn_kernel, n_layers=L, lorder=lorder, lstride=lstride, t_len=T,
        bblk=bblk, tc=Tc, tc_pad=tc_pad, d_out=D_out)

    def full_spec(shape):
        n = len(shape)
        return pl.BlockSpec(shape, lambda b, _n=n: (0,) * _n)

    grid_spec = pltpu.PrefetchScalarGridSpec(
        num_scalar_prefetch=0,
        grid=grid,
        in_specs=[
            pl.BlockSpec((bblk, T, Dinp), lambda b: (b, 0, 0)),
            full_spec(w_in1.shape), full_spec(b_in1.shape),
            full_spec(w_in2.shape), full_spec(b_in2.shape),
            full_spec(lin_w.shape), full_spec(conv_w.shape),
            full_spec(aff_w.shape), full_spec(aff_b.shape),
            pl.BlockSpec((bblk, L * tc_pad, Pp), lambda b: (b, 0, 0)),
            full_spec(w_out1.shape), full_spec(b_out1.shape),
            full_spec(w_out2.shape), full_spec(b_out2.shape),
        ],
        out_specs=[
            pl.BlockSpec((bblk, T, Doutp), lambda b: (b, 0, 0)),
            pl.BlockSpec((bblk, L * tc_pad, Pp), lambda b: (b, 0, 0)),
        ],
    )

    y_p, cache_out_flat = pl.pallas_call(
        kernel,
        out_shape=(
            jax.ShapeDtypeStruct((B_pad, T, Doutp), f32),
            jax.ShapeDtypeStruct((B_pad, L * tc_pad, Pp), f32),
        ),
        grid_spec=grid_spec,
        input_output_aliases={9: 1},              # in-place cache update
        compiler_params=pltpu.CompilerParams(
            dimension_semantics=("parallel",),
            vmem_limit_bytes=48 * 1024 * 1024),
    )(x_p, w_in1, b_in1, w_in2, b_in2, lin_w, conv_w, aff_w, aff_b,
      cache_flat, w_out1, b_out1, w_out2, b_out2)

    y = y_p[:B, :, :D_out]
    cache_out = cache_out_flat.reshape(B_pad, L, tc_pad, Pp)[:B, :, tc_pad - Tc:, :P]
    return y, cache_out


def ref_forward(x, params, caches, *, lorder, lstride):
    """Pure-JAX reference mirroring the PyTorch forward (bf16 MXU operands,
    f32 accumulation, exactly like the kernel)."""
    f32, bf16 = jnp.float32, jnp.bfloat16
    B, L, Tc, P = caches.shape
    T = x.shape[1]

    def mm(a, w):
        return jnp.dot(a.astype(bf16), w.astype(bf16), preferred_element_type=f32)

    h = mm(x, params["w_in1"]) + params["b_in1"]
    h = mm(h, params["w_in2"]) + params["b_in2"]
    h = jnp.maximum(h, 0.0)
    new_caches = []
    for l in range(L):
        p = mm(h, params["lin_w"][l])                            # (B, T, P)
        ybuf = jnp.concatenate([caches[:, l], p], axis=1)        # (B, Tc+T, P)
        new_caches.append(ybuf[:, ybuf.shape[1] - Tc:, :])
        conv = jnp.zeros_like(p)
        for k in range(lorder):
            conv = conv + (ybuf[:, k * lstride:k * lstride + T, :]
                           * params["conv_w"][l, k][None, None, :])
        p = p + conv
        h = jnp.maximum(mm(p, params["aff_w"][l]) + params["aff_b"][l][None], 0.0)
    o = mm(h, params["w_out1"]) + params["b_out1"]
    o = mm(o, params["w_out2"]) + params["b_out2"]
    return jax.nn.softmax(o, axis=-1), jnp.stack(new_caches, axis=1)


if __name__ == "__main__":
    # Small deterministic config (logical dims stay small; wrapper pads lanes).
    B, T = 6, 8
    D_in, D_aff1, D_lin, P, D_aff2, D_out = 32, 32, 32, 32, 32, 32
    L = 2                      # number of FSMN BasicBlocks
    lorder, lstride = 4, 1     # left-order / left-stride (rorder = 0)
    Tc = (lorder - 1) * lstride

    key = jax.random.PRNGKey(0)
    ks = jax.random.split(key, 16)

    def rnd(k, shape, scale=0.1):
        return (scale * jax.random.normal(k, shape)).astype(jnp.float32)

    # Linear weights stored pre-transposed as (in, out) so kernel does x @ W.
    params = {
        "w_in1": rnd(ks[0], (D_in, D_aff1)),  "b_in1": rnd(ks[1], (1, D_aff1)),
        "w_in2": rnd(ks[2], (D_aff1, D_lin)), "b_in2": rnd(ks[3], (1, D_lin)),
        "lin_w":  rnd(ks[4], (L, D_lin, P)),                 # LinearTransform (no bias)
        "conv_w": rnd(ks[5], (L, lorder, P)),                # conv_left weight [d,0,k,0] -> [l,k,d]
        "aff_w":  rnd(ks[6], (L, P, D_lin)),                 # AffineTransform
        "aff_b":  rnd(ks[7], (L, 1, D_lin)),
        "w_out1": rnd(ks[8], (D_lin, D_aff2)), "b_out1": rnd(ks[9], (1, D_aff2)),
        "w_out2": rnd(ks[10], (D_aff2, D_out)), "b_out2": rnd(ks[11], (1, D_out)),
    }

    x = rnd(ks[12], (B, T, D_in), scale=1.0)
    caches = rnd(ks[13], (B, L, Tc, P), scale=1.0)           # batch-major per-layer caches

    # bblk=4 -> B padded 6->8, grid=(2,): exercises batch folding, batch padding,
    # and gives an even grid length for v7x's two TensorCores.
    y, cache_out = fsmn_export_forward(x, params, caches,
                                       lorder=lorder, lstride=lstride, bblk=4)
    jax.block_until_ready((y, cache_out))

    y_ref, caches_ref = ref_forward(x, params, caches,
                                    lorder=lorder, lstride=lstride)
    assert y.shape == y_ref.shape and cache_out.shape == caches_ref.shape
    assert jnp.allclose(y, y_ref, atol=2e-3, rtol=2e-3), "output mismatch"
    assert jnp.allclose(cache_out, caches_ref, atol=1e-3, rtol=1e-3), "cache mismatch"

    print("KERNEL_OK")
</pallas_src>

<mosaic_0001>
module attributes {stable_mosaic.version = 11 : i64} {
  func.func @fsmn_kernel(%arg0: i32, %arg1: memref<4x8x128xf32, #tpu.memory_space<vmem>>, %arg2: memref<128x128xbf16, #tpu.memory_space<vmem>>, %arg3: memref<1x128xf32, #tpu.memory_space<vmem>>, %arg4: memref<128x128xbf16, #tpu.memory_space<vmem>>, %arg5: memref<1x128xf32, #tpu.memory_space<vmem>>, %arg6: memref<2x128x128xbf16, #tpu.memory_space<vmem>>, %arg7: memref<2x4x128xf32, #tpu.memory_space<vmem>>, %arg8: memref<2x128x128xbf16, #tpu.memory_space<vmem>>, %arg9: memref<2x1x128xf32, #tpu.memory_space<vmem>>, %arg10: memref<4x16x128xf32, #tpu.memory_space<vmem>>, %arg11: memref<128x128xbf16, #tpu.memory_space<vmem>>, %arg12: memref<1x128xf32, #tpu.memory_space<vmem>>, %arg13: memref<128x128xbf16, #tpu.memory_space<vmem>>, %arg14: memref<1x128xf32, #tpu.memory_space<vmem>>, %arg15: memref<4x8x128xf32, #tpu.memory_space<vmem>>, %arg16: memref<4x16x128xf32, #tpu.memory_space<vmem>>) attributes {dimension_semantics = [#tpu.dimension_semantics<parallel>], iteration_bounds = array<i64: 2>, scalar_prefetch = 0 : i64, scratch_operands = 0 : i64, tpu.core_type = #tpu.core_type<tc>, window_params = [{transform_indices = @transform_0, window_bounds = array<i64: 4, 8, 128>}, {pipeline_mode = #tpu.pipeline_mode<synchronous>, transform_indices = @transform_1, window_bounds = array<i64: 128, 128>}, {pipeline_mode = #tpu.pipeline_mode<synchronous>, transform_indices = @transform_2, window_bounds = array<i64: 1, 128>}, {pipeline_mode = #tpu.pipeline_mode<synchronous>, transform_indices = @transform_3, window_bounds = array<i64: 128, 128>}, {pipeline_mode = #tpu.pipeline_mode<synchronous>, transform_indices = @transform_4, window_bounds = array<i64: 1, 128>}, {pipeline_mode = #tpu.pipeline_mode<synchronous>, transform_indices = @transform_5, window_bounds = array<i64: 2, 128, 128>}, {pipeline_mode = #tpu.pipeline_mode<synchronous>, transform_indices = @transform_6, window_bounds = array<i64: 2, 4, 128>}, {pipeline_mode = #tpu.pipeline_mode<synchronous>, transform_indices = @transform_7, window_bounds = array<i64: 2, 128, 128>}, {pipeline_mode = #tpu.pipeline_mode<synchronous>, transform_indices = @transform_8, window_bounds = array<i64: 2, 1, 128>}, {transform_indices = @transform_9, window_bounds = array<i64: 4, 16, 128>}, {pipeline_mode = #tpu.pipeline_mode<synchronous>, transform_indices = @transform_10, window_bounds = array<i64: 128, 128>}, {pipeline_mode = #tpu.pipeline_mode<synchronous>, transform_indices = @transform_11, window_bounds = array<i64: 1, 128>}, {pipeline_mode = #tpu.pipeline_mode<synchronous>, transform_indices = @transform_12, window_bounds = array<i64: 128, 128>}, {pipeline_mode = #tpu.pipeline_mode<synchronous>, transform_indices = @transform_13, window_bounds = array<i64: 1, 128>}, {transform_indices = @transform_14, window_bounds = array<i64: 4, 8, 128>}, {transform_indices = @transform_15, window_bounds = array<i64: 4, 16, 128>}]} {
    %c0 = arith.constant 0 : index
    %c0_0 = arith.constant 0 : index
    %c0_1 = arith.constant 0 : index
    %0 = vector.load %arg1[%c0, %c0_0, %c0_1] : memref<4x8x128xf32, #tpu.memory_space<vmem>>, vector<4x8x128xf32>
    %1 = vector.shape_cast %0 : vector<4x8x128xf32> to vector<32x128xf32>
    %2 = arith.truncf %1 : vector<32x128xf32> to vector<32x128xbf16>
    %c0_2 = arith.constant 0 : index
    %c0_3 = arith.constant 0 : index
    %3 = vector.load %arg2[%c0_2, %c0_3] : memref<128x128xbf16, #tpu.memory_space<vmem>>, vector<128x128xbf16>
    %cst = arith.constant dense<0.000000e+00> : vector<32x128xf32>
    %4 = tpu.matmul %2, %3, %cst {dimension_numbers = #tpu.dot_dimension_numbers<[1], [0], [0], [1], [0, 0, 1, 1], [], []>} : vector<32x128xbf16>, vector<128x128xbf16>, vector<32x128xf32> -> vector<32x128xf32>
    %c0_4 = arith.constant 0 : index
    %c0_5 = arith.constant 0 : index
    %5 = vector.load %arg3[%c0_4, %c0_5] : memref<1x128xf32, #tpu.memory_space<vmem>>, vector<1x128xf32>
    %6 = vector.broadcast %5 : vector<1x128xf32> to vector<32x128xf32>
    %7 = arith.addf %4, %6 : vector<32x128xf32>
    %8 = arith.truncf %7 : vector<32x128xf32> to vector<32x128xbf16>
    %c0_6 = arith.constant 0 : index
    %c0_7 = arith.constant 0 : index
    %9 = vector.load %arg4[%c0_6, %c0_7] : memref<128x128xbf16, #tpu.memory_space<vmem>>, vector<128x128xbf16>
    %cst_8 = arith.constant dense<0.000000e+00> : vector<32x128xf32>
    %10 = tpu.matmul %8, %9, %cst_8 {dimension_numbers = #tpu.dot_dimension_numbers<[1], [0], [0], [1], [0, 0, 1, 1], [], []>} : vector<32x128xbf16>, vector<128x128xbf16>, vector<32x128xf32> -> vector<32x128xf32>
    %c0_9 = arith.constant 0 : index
    %c0_10 = arith.constant 0 : index
    %11 = vector.load %arg5[%c0_9, %c0_10] : memref<1x128xf32, #tpu.memory_space<vmem>>, vector<1x128xf32>
    %12 = vector.broadcast %11 : vector<1x128xf32> to vector<32x128xf32>
    %13 = arith.addf %10, %12 : vector<32x128xf32>
    %cst_11 = arith.constant 0.000000e+00 : f32
    %14 = vector.broadcast %cst_11 : f32 to vector<32x128xf32>
    %15 = arith.maximumf %13, %14 : vector<32x128xf32>
    %16 = arith.truncf %15 : vector<32x128xf32> to vector<32x128xbf16>
    %c0_12 = arith.constant 0 : index
    %c0_13 = arith.constant 0 : index
    %c0_14 = arith.constant 0 : index
    %17 = vector.load %arg6[%c0_12, %c0_13, %c0_14] : memref<2x128x128xbf16, #tpu.memory_space<vmem>>, vector<1x128x128xbf16>
    %18 = vector.shape_cast %17 : vector<1x128x128xbf16> to vector<128x128xbf16>
    %cst_15 = arith.constant dense<0.000000e+00> : vector<32x128xf32>
    %19 = tpu.matmul %16, %18, %cst_15 {dimension_numbers = #tpu.dot_dimension_numbers<[1], [0], [0], [1], [0, 0, 1, 1], [], []>} : vector<32x128xbf16>, vector<128x128xbf16>, vector<32x128xf32> -> vector<32x128xf32>
    %20 = vector.shape_cast %19 : vector<32x128xf32> to vector<4x8x128xf32>
    %c0_16 = arith.constant 0 : index
    %c0_17 = arith.constant 0 : index
    %c0_18 = arith.constant 0 : index
    %21 = vector.load %arg10[%c0_16, %c0_17, %c0_18] : memref<4x16x128xf32, #tpu.memory_space<vmem>>, vector<4x8x128xf32>
    %22 = tpu.concatenate %21, %20 in 1 : vector<4x8x128xf32>, vector<4x8x128xf32> -> vector<4x16x128xf32>
    %23 = vector.extract_strided_slice %22 {offsets = [0, 8, 0], sizes = [4, 8, 128], strides = [1, 1, 1]} : vector<4x16x128xf32> to vector<4x8x128xf32>
    %c0_19 = arith.constant 0 : index
    %c0_20 = arith.constant 0 : index
    %c0_21 = arith.constant 0 : index
    %24 = vector.load %arg16[%c0_19, %c0_20, %c0_21] : memref<4x16x128xf32, #tpu.memory_space<vmem>>, vector<4x8x128xf32>
    tpu.vector_store %arg16[%c0_19, %c0_20, %c0_21], %23 {strides = array<i32>} : memref<4x16x128xf32, #tpu.memory_space<vmem>>, vector<4x8x128xf32>,
    %c0_22 = arith.constant 0 : index
    %c0_23 = arith.constant 0 : index
    %c0_24 = arith.constant 0 : index
    %25 = vector.load %arg7[%c0_22, %c0_23, %c0_24] : memref<2x4x128xf32, #tpu.memory_space<vmem>>, vector<1x4x128xf32>
    %26 = vector.shape_cast %25 : vector<1x4x128xf32> to vector<4x128xf32>
    %cst_25 = arith.constant 0.000000e+00 : f32
    %27 = vector.broadcast %cst_25 : f32 to vector<4x8x128xf32>
    %28 = vector.extract_strided_slice %22 {offsets = [0, 5, 0], sizes = [4, 8, 128], strides = [1, 1, 1]} : vector<4x16x128xf32> to vector<4x8x128xf32>
    %29 = vector.extract_strided_slice %26 {offsets = [0, 0], sizes = [1, 128], strides = [1, 1]} : vector<4x128xf32> to vector<1x128xf32>
    %30 = vector.shape_cast %29 : vector<1x128xf32> to vector<1x1x128xf32>
    %31 = vector.broadcast %30 : vector<1x1x128xf32> to vector<4x8x128xf32>
    %32 = arith.mulf %28, %31 : vector<4x8x128xf32>
    %33 = arith.addf %27, %32 : vector<4x8x128xf32>
    %34 = vector.extract_strided_slice %22 {offsets = [0, 6, 0], sizes = [4, 8, 128], strides = [1, 1, 1]} : vector<4x16x128xf32> to vector<4x8x128xf32>
    %35 = vector.extract_strided_slice %26 {offsets = [1, 0], sizes = [1, 128], strides = [1, 1]} : vector<4x128xf32> to vector<1x128xf32>
    %36 = vector.shape_cast %35 : vector<1x128xf32> to vector<1x1x128xf32>
    %37 = vector.broadcast %36 : vector<1x1x128xf32> to vector<4x8x128xf32>
    %38 = arith.mulf %34, %37 : vector<4x8x128xf32>
    %39 = arith.addf %33, %38 : vector<4x8x128xf32>
    %40 = vector.extract_strided_slice %22 {offsets = [0, 7, 0], sizes = [4, 8, 128], strides = [1, 1, 1]} : vector<4x16x128xf32> to vector<4x8x128xf32>
    %41 = vector.extract_strided_slice %26 {offsets = [2, 0], sizes = [1, 128], strides = [1, 1]} : vector<4x128xf32> to vector<1x128xf32>
    %42 = vector.shape_cast %41 : vector<1x128xf32> to vector<1x1x128xf32>
    %43 = vector.broadcast %42 : vector<1x1x128xf32> to vector<4x8x128xf32>
    %44 = arith.mulf %40, %43 : vector<4x8x128xf32>
    %45 = arith.addf %39, %44 : vector<4x8x128xf32>
    %46 = vector.extract_strided_slice %22 {offsets = [0, 8, 0], sizes = [4, 8, 128], strides = [1, 1, 1]} : vector<4x16x128xf32> to vector<4x8x128xf32>
    %47 = vector.extract_strided_slice %26 {offsets = [3, 0], sizes = [1, 128], strides = [1, 1]} : vector<4x128xf32> to vector<1x128xf32>
    %48 = vector.shape_cast %47 : vector<1x128xf32> to vector<1x1x128xf32>
    %49 = vector.broadcast %48 : vector<1x1x128xf32> to vector<4x8x128xf32>
    %50 = arith.mulf %46, %49 : vector<4x8x128xf32>
    %51 = arith.addf %45, %50 : vector<4x8x128xf32>
    %52 = arith.addf %20, %51 : vector<4x8x128xf32>
    %53 = vector.shape_cast %52 : vector<4x8x128xf32> to vector<32x128xf32>
    %54 = arith.truncf %53 : vector<32x128xf32> to vector<32x128xbf16>
    %c0_26 = arith.constant 0 : index
    %c0_27 = arith.constant 0 : index
    %c0_28 = arith.constant 0 : index
    %55 = vector.load %arg8[%c0_26, %c0_27, %c0_28] : memref<2x128x128xbf16, #tpu.memory_space<vmem>>, vector<1x128x128xbf16>
    %56 = vector.shape_cast %55 : vector<1x128x128xbf16> to vector<128x128xbf16>
    %cst_29 = arith.constant dense<0.000000e+00> : vector<32x128xf32>
    %57 = tpu.matmul %54, %56, %cst_29 {dimension_numbers = #tpu.dot_dimension_numbers<[1], [0], [0], [1], [0, 0, 1, 1], [], []>} : vector<32x128xbf16>, vector<128x128xbf16>, vector<32x128xf32> -> vector<32x128xf32>
    %c0_30 = arith.constant 0 : index
    %c0_31 = arith.constant 0 : index
    %c0_32 = arith.constant 0 : index
    %58 = vector.load %arg9[%c0_30, %c0_31, %c0_32] : memref<2x1x128xf32, #tpu.memory_space<vmem>>, vector<1x1x128xf32>
    %59 = vector.shape_cast %58 : vector<1x1x128xf32> to vector<1x128xf32>
    %60 = vector.broadcast %59 : vector<1x128xf32> to vector<32x128xf32>
    %61 = arith.addf %57, %60 : vector<32x128xf32>
    %cst_33 = arith.constant 0.000000e+00 : f32
    %62 = vector.broadcast %cst_33 : f32 to vector<32x128xf32>
    %63 = arith.maximumf %61, %62 : vector<32x128xf32>
    %64 = arith.truncf %63 : vector<32x128xf32> to vector<32x128xbf16>
    %c1 = arith.constant 1 : index
    %c0_34 = arith.constant 0 : index
    %c0_35 = arith.constant 0 : index
    %65 = vector.load %arg6[%c1, %c0_34, %c0_35] : memref<2x128x128xbf16, #tpu.memory_space<vmem>>, vector<1x128x128xbf16>
    %66 = vector.shape_cast %65 : vector<1x128x128xbf16> to vector<128x128xbf16>
    %cst_36 = arith.constant dense<0.000000e+00> : vector<32x128xf32>
    %67 = tpu.matmul %64, %66, %cst_36 {dimension_numbers = #tpu.dot_dimension_numbers<[1], [0], [0], [1], [0, 0, 1, 1], [], []>} : vector<32x128xbf16>, vector<128x128xbf16>, vector<32x128xf32> -> vector<32x128xf32>
    %68 = vector.shape_cast %67 : vector<32x128xf32> to vector<4x8x128xf32>
    %c0_37 = arith.constant 0 : index
    %c8 = arith.constant 8 : index
    %c0_38 = arith.constant 0 : index
    %69 = vector.load %arg10[%c0_37, %c8, %c0_38] : memref<4x16x128xf32, #tpu.memory_space<vmem>>, vector<4x8x128xf32>
    %70 = tpu.concatenate %69, %68 in 1 : vector<4x8x128xf32>, vector<4x8x128xf32> -> vector<4x16x128xf32>
    %71 = vector.extract_strided_slice %70 {offsets = [0, 8, 0], sizes = [4, 8, 128], strides = [1, 1, 1]} : vector<4x16x128xf32> to vector<4x8x128xf32>
    %c0_39 = arith.constant 0 : index
    %c8_40 = arith.constant 8 : index
    %c0_41 = arith.constant 0 : index
    %72 = vector.load %arg16[%c0_39, %c8_40, %c0_41] : memref<4x16x128xf32, #tpu.memory_space<vmem>>, vector<4x8x128xf32>
    tpu.vector_store %arg16[%c0_39, %c8_40, %c0_41], %71 {strides = array<i32>} : memref<4x16x128xf32, #tpu.memory_space<vmem>>, vector<4x8x128xf32>,
    %c1_42 = arith.constant 1 : index
    %c0_43 = arith.constant 0 : index
    %c0_44 = arith.constant 0 : index
    %73 = vector.load %arg7[%c1_42, %c0_43, %c0_44] : memref<2x4x128xf32, #tpu.memory_space<vmem>>, vector<1x4x128xf32>
    %74 = vector.shape_cast %73 : vector<1x4x128xf32> to vector<4x128xf32>
    %cst_45 = arith.constant 0.000000e+00 : f32
    %75 = vector.broadcast %cst_45 : f32 to vector<4x8x128xf32>
    %76 = vector.extract_strided_slice %70 {offsets = [0, 5, 0], sizes = [4, 8, 128], strides = [1, 1, 1]} : vector<4x16x128xf32> to vector<4x8x128xf32>
    %77 = vector.extract_strided_slice %74 {offsets = [0, 0], sizes = [1, 128], strides = [1, 1]} : vector<4x128xf32> to vector<1x128xf32>
    %78 = vector.shape_cast %77 : vector<1x128xf32> to vector<1x1x128xf32>
    %79 = vector.broadcast %78 : vector<1x1x128xf32> to vector<4x8x128xf32>
    %80 = arith.mulf %76, %79 : vector<4x8x128xf32>
    %81 = arith.addf %75, %80 : vector<4x8x128xf32>
    %82 = vector.extract_strided_slice %70 {offsets = [0, 6, 0], sizes = [4, 8, 128], strides = [1, 1, 1]} : vector<4x16x128xf32> to vector<4x8x128xf32>
    %83 = vector.extract_strided_slice %74 {offsets = [1, 0], sizes = [1, 128], strides = [1, 1]} : vector<4x128xf32> to vector<1x128xf32>
    %84 = vector.shape_cast %83 : vector<1x128xf32> to vector<1x1x128xf32>
    %85 = vector.broadcast %84 : vector<1x1x128xf32> to vector<4x8x128xf32>
    %86 = arith.mulf %82, %85 : vector<4x8x128xf32>
    %87 = arith.addf %81, %86 : vector<4x8x128xf32>
    %88 = vector.extract_strided_slice %70 {offsets = [0, 7, 0], sizes = [4, 8, 128], strides = [1, 1, 1]} : vector<4x16x128xf32> to vector<4x8x128xf32>
    %89 = vector.extract_strided_slice %74 {offsets = [2, 0], sizes = [1, 128], strides = [1, 1]} : vector<4x128xf32> to vector<1x128xf32>
    %90 = vector.shape_cast %89 : vector<1x128xf32> to vector<1x1x128xf32>
    %91 = vector.broadcast %90 : vector<1x1x128xf32> to vector<4x8x128xf32>
    %92 = arith.mulf %88, %91 : vector<4x8x128xf32>
    %93 = arith.addf %87, %92 : vector<4x8x128xf32>
    %94 = vector.extract_strided_slice %70 {offsets = [0, 8, 0], sizes = [4, 8, 128], strides = [1, 1, 1]} : vector<4x16x128xf32> to vector<4x8x128xf32>
    %95 = vector.extract_strided_slice %74 {offsets = [3, 0], sizes = [1, 128], strides = [1, 1]} : vector<4x128xf32> to vector<1x128xf32>
    %96 = vector.shape_cast %95 : vector<1x128xf32> to vector<1x1x128xf32>
    %97 = vector.broadcast %96 : vector<1x1x128xf32> to vector<4x8x128xf32>
    %98 = arith.mulf %94, %97 : vector<4x8x128xf32>
    %99 = arith.addf %93, %98 : vector<4x8x128xf32>
    %100 = arith.addf %68, %99 : vector<4x8x128xf32>
    %101 = vector.shape_cast %100 : vector<4x8x128xf32> to vector<32x128xf32>
    %102 = arith.truncf %101 : vector<32x128xf32> to vector<32x128xbf16>
    %c1_46 = arith.constant 1 : index
    %c0_47 = arith.constant 0 : index
    %c0_48 = arith.constant 0 : index
    %103 = vector.load %arg8[%c1_46, %c0_47, %c0_48] : memref<2x128x128xbf16, #tpu.memory_space<vmem>>, vector<1x128x128xbf16>
    %104 = vector.shape_cast %103 : vector<1x128x128xbf16> to vector<128x128xbf16>
    %cst_49 = arith.constant dense<0.000000e+00> : vector<32x128xf32>
    %105 = tpu.matmul %102, %104, %cst_49 {dimension_numbers = #tpu.dot_dimension_numbers<[1], [0], [0], [1], [0, 0, 1, 1], [], []>} : vector<32x128xbf16>, vector<128x128xbf16>, vector<32x128xf32> -> vector<32x128xf32>
    %c1_50 = arith.constant 1 : index
    %c0_51 = arith.constant 0 : index
    %c0_52 = arith.constant 0 : index
    %106 = vector.load %arg9[%c1_50, %c0_51, %c0_52] : memref<2x1x128xf32, #tpu.memory_space<vmem>>, vector<1x1x128xf32>
    %107 = vector.shape_cast %106 : vector<1x1x128xf32> to vector<1x128xf32>
    %108 = vector.broadcast %107 : vector<1x128xf32> to vector<32x128xf32>
    %109 = arith.addf %105, %108 : vector<32x128xf32>
    %cst_53 = arith.constant 0.000000e+00 : f32
    %110 = vector.broadcast %cst_53 : f32 to vector<32x128xf32>
    %111 = arith.maximumf %109, %110 : vector<32x128xf32>
    %112 = arith.truncf %111 : vector<32x128xf32> to vector<32x128xbf16>
    %c0_54 = arith.constant 0 : index
    %c0_55 = arith.constant 0 : index
    %113 = vector.load %arg11[%c0_54, %c0_55] : memref<128x128xbf16, #tpu.memory_space<vmem>>, vector<128x128xbf16>
    %cst_56 = arith.constant dense<0.000000e+00> : vector<32x128xf32>
    %114 = tpu.matmul %112, %113, %cst_56 {dimension_numbers = #tpu.dot_dimension_numbers<[1], [0], [0], [1], [0, 0, 1, 1], [], []>} : vector<32x128xbf16>, vector<128x128xbf16>, vector<32x128xf32> -> vector<32x128xf32>
    %c0_57 = arith.constant 0 : index
    %c0_58 = arith.constant 0 : index
    %115 = vector.load %arg12[%c0_57, %c0_58] : memref<1x128xf32, #tpu.memory_space<vmem>>, vector<1x128xf32>
    %116 = vector.broadcast %115 : vector<1x128xf32> to vector<32x128xf32>
    %117 = arith.addf %114, %116 : vector<32x128xf32>
    %118 = arith.truncf %117 : vector<32x128xf32> to vector<32x128xbf16>
    %c0_59 = arith.constant 0 : index
    %c0_60 = arith.constant 0 : index
    %119 = vector.load %arg13[%c0_59, %c0_60] : memref<128x128xbf16, #tpu.memory_space<vmem>>, vector<128x128xbf16>
    %cst_61 = arith.constant dense<0.000000e+00> : vector<32x128xf32>
    %120 = tpu.matmul %118, %119, %cst_61 {dimension_numbers = #tpu.dot_dimension_numbers<[1], [0], [0], [1], [0, 0, 1, 1], [], []>} : vector<32x128xbf16>, vector<128x128xbf16>, vector<32x128xf32> -> vector<32x128xf32>
    %c0_62 = arith.constant 0 : index
    %c0_63 = arith.constant 0 : index
    %121 = vector.load %arg14[%c0_62, %c0_63] : memref<1x128xf32, #tpu.memory_space<vmem>>, vector<1x128xf32>
    %122 = vector.broadcast %121 : vector<1x128xf32> to vector<32x128xf32>
    %123 = arith.addf %120, %122 : vector<32x128xf32>
    %124 = tpu.iota {dimensions = array<i32: 1>} : vector<32x128xi32>
    %c32_i32 = arith.constant 32 : i32
    %125 = vector.broadcast %c32_i32 : i32 to vector<32x128xi32>
    %126 = arith.cmpi slt, %124, %125 : vector<32x128xi32>
    %cst_64 = arith.constant -1.000000e+30 : f32
    %127 = vector.broadcast %cst_64 : f32 to vector<32x128xf32>
    %128 = arith.select %126, %123, %127 : vector<32x128xi1>, vector<32x128xf32>
    %cst_65 = arith.constant dense<0xFF800000> : vector<32xf32>
    %129 = vector.multi_reduction <maximumf>, %128, %cst_65 [1] : vector<32x128xf32> to vector<32xf32>
    %130 = vector.shape_cast %129 : vector<32xf32> to vector<32x1xf32>
    %131 = vector.broadcast %130 : vector<32x1xf32> to vector<32x128xf32>
    %132 = arith.subf %128, %131 : vector<32x128xf32>
    %133 = math.exp %132 : vector<32x128xf32>
    %cst_66 = arith.constant dense<0.000000e+00> : vector<32xf32>
    %134 = vector.multi_reduction <add>, %133, %cst_66 [1] : vector<32x128xf32> to vector<32xf32>
    %135 = vector.shape_cast %134 : vector<32xf32> to vector<32x1xf32>
    %136 = tpu.reciprocal %135 : vector<32x1xf32> -> vector<32x1xf32>
    %137 = vector.broadcast %136 : vector<32x1xf32> to vector<32x128xf32>
    %138 = arith.mulf %133, %137 : vector<32x128xf32>
    %139 = vector.shape_cast %138 : vector<32x128xf32> to vector<4x8x128xf32>
    %c0_67 = arith.constant 0 : index
    %c0_68 = arith.constant 0 : index
    %c0_69 = arith.constant 0 : index
    %140 = vector.load %arg15[%c0_67, %c0_68, %c0_69] : memref<4x8x128xf32, #tpu.memory_space<vmem>>, vector<4x8x128xf32>
    tpu.vector_store %arg15[%c0_67, %c0_68, %c0_69], %139 {strides = array<i32>} : memref<4x8x128xf32, #tpu.memory_space<vmem>>, vector<4x8x128xf32>,
    return
  }
  func.func @transform_0(%arg0: i32) -> (i32, i32, i32) {
    %c0_i32 = arith.constant 0 : i32
    %c0_i32_0 = arith.constant 0 : i32
    %c0_i32_1 = arith.constant 0 : i32
    return %arg0, %c0_i32, %c0_i32_0 : i32, i32, i32
  }
  func.func @transform_1(%arg0: i32) -> (i32, i32) {
    %c0_i32 = arith.constant 0 : i32
    %c0_i32_0 = arith.constant 0 : i32
    %c0_i32_1 = arith.constant 0 : i32
    return %c0_i32, %c0_i32_0 : i32, i32
  }
  func.func @transform_2(%arg0: i32) -> (i32, i32) {
    %c0_i32 = arith.constant 0 : i32
    %c0_i32_0 = arith.constant 0 : i32
    %c0_i32_1 = arith.constant 0 : i32
    return %c0_i32, %c0_i32_0 : i32, i32
  }
  func.func @transform_3(%arg0: i32) -> (i32, i32) {
    %c0_i32 = arith.constant 0 : i32
    %c0_i32_0 = arith.constant 0 : i32
    %c0_i32_1 = arith.constant 0 : i32
    return %c0_i32, %c0_i32_0 : i32, i32
  }
  func.func @transform_4(%arg0: i32) -> (i32, i32) {
    %c0_i32 = arith.constant 0 : i32
    %c0_i32_0 = arith.constant 0 : i32
    %c0_i32_1 = arith.constant 0 : i32
    return %c0_i32, %c0_i32_0 : i32, i32
  }
  func.func @transform_5(%arg0: i32) -> (i32, i32, i32) {
    %c0_i32 = arith.constant 0 : i32
    %c0_i32_0 = arith.constant 0 : i32
    %c0_i32_1 = arith.constant 0 : i32
    %c0_i32_2 = arith.constant 0 : i32
    return %c0_i32, %c0_i32_0, %c0_i32_1 : i32, i32, i32
  }
  func.func @transform_6(%arg0: i32) -> (i32, i32, i32) {
    %c0_i32 = arith.constant 0 : i32
    %c0_i32_0 = arith.constant 0 : i32
    %c0_i32_1 = arith.constant 0 : i32
    %c0_i32_2 = arith.constant 0 : i32
    return %c0_i32, %c0_i32_0, %c0_i32_1 : i32, i32, i32
  }
  func.func @transform_7(%arg0: i32) -> (i32, i32, i32) {
    %c0_i32 = arith.constant 0 : i32
    %c0_i32_0 = arith.constant 0 : i32
    %c0_i32_1 = arith.constant 0 : i32
    %c0_i32_2 = arith.constant 0 : i32
    return %c0_i32, %c0_i32_0, %c0_i32_1 : i32, i32, i32
  }
  func.func @transform_8(%arg0: i32) -> (i32, i32, i32) {
    %c0_i32 = arith.constant 0 : i32
    %c0_i32_0 = arith.constant 0 : i32
    %c0_i32_1 = arith.constant 0 : i32
    %c0_i32_2 = arith.constant 0 : i32
    return %c0_i32, %c0_i32_0, %c0_i32_1 : i32, i32, i32
  }
  func.func @transform_9(%arg0: i32) -> (i32, i32, i32) {
    %c0_i32 = arith.constant 0 : i32
    %c0_i32_0 = arith.constant 0 : i32
    %c0_i32_1 = arith.constant 0 : i32
    return %arg0, %c0_i32, %c0_i32_0 : i32, i32, i32
  }
  func.func @transform_10(%arg0: i32) -> (i32, i32) {
    %c0_i32 = arith.constant 0 : i32
    %c0_i32_0 = arith.constant 0 : i32
    %c0_i32_1 = arith.constant 0 : i32
    return %c0_i32, %c0_i32_0 : i32, i32
  }
  func.func @transform_11(%arg0: i32) -> (i32, i32) {
    %c0_i32 = arith.constant 0 : i32
    %c0_i32_0 = arith.constant 0 : i32
    %c0_i32_1 = arith.constant 0 : i32
    return %c0_i32, %c0_i32_0 : i32, i32
  }
  func.func @transform_12(%arg0: i32) -> (i32, i32) {
    %c0_i32 = arith.constant 0 : i32
    %c0_i32_0 = arith.constant 0 : i32
    %c0_i32_1 = arith.constant 0 : i32
    return %c0_i32, %c0_i32_0 : i32, i32
  }
  func.func @transform_13(%arg0: i32) -> (i32, i32) {
    %c0_i32 = arith.constant 0 : i32
    %c0_i32_0 = arith.constant 0 : i32
    %c0_i32_1 = arith.constant 0 : i32
    return %c0_i32, %c0_i32_0 : i32, i32
  }
  func.func @transform_14(%arg0: i32) -> (i32, i32, i32) {
    %c0_i32 = arith.constant 0 : i32
    %c0_i32_0 = arith.constant 0 : i32
    %c0_i32_1 = arith.constant 0 : i32
    return %arg0, %c0_i32, %c0_i32_0 : i32, i32, i32
  }
  func.func @transform_15(%arg0: i32) -> (i32, i32, i32) {
    %c0_i32 = arith.constant 0 : i32
    %c0_i32_0 = arith.constant 0 : i32
    %c0_i32_1 = arith.constant 0 : i32
    return %arg0, %c0_i32, %c0_i32_0 : i32, i32, i32
  }
}

</mosaic_0001>

<llo_original>
// kernel: tpu_custom_call.1
$region0: #{tpu_custom_call.1}
  #allocation0 [shape = 'u32[]', space=smem, size = 0x4, offset = 0x4, fixed_abs, tag = 'smem constant byte address 0x4 - core index']
  #allocation1 [shape = 'u32[144,128]{1,0:T(1,128)}', space=vmem, size = 0x12000, scoped, tag = 'internal scratch']
  %s0 = inlined_call_operand.hbm [shape: f32[8,8,128], index: 0, kind: input, shape index: {}]
  %s1 = inlined_call_operand.hbm [shape: bf16[128,128], index: 1, kind: input, shape index: {}]
  %s2 = inlined_call_operand.vmem [shape: f32[1,128], index: 2, kind: input, shape index: {}]
  %s3 = inlined_call_operand.hbm [shape: bf16[128,128], index: 3, kind: input, shape index: {}]
  %s4 = inlined_call_operand.vmem [shape: f32[1,128], index: 4, kind: input, shape index: {}]
  %s5 = inlined_call_operand.vmem [shape: bf16[2,128,128], index: 5, kind: input, shape index: {}]
  %s6 = inlined_call_operand.vmem [shape: f32[2,4,128], index: 6, kind: input, shape index: {}]
  %s7 = inlined_call_operand.vmem [shape: bf16[2,128,128], index: 7, kind: input, shape index: {}]
  %s8 = inlined_call_operand.vmem [shape: f32[2,1,128], index: 8, kind: input, shape index: {}]
  %s9 = inlined_call_operand.hbm [shape: f32[8,16,128], index: 9, kind: input, shape index: {}, may-alias: {9,15}]
  %s10 = inlined_call_operand.hbm [shape: bf16[128,128], index: 10, kind: input, shape index: {}]
  %s11 = inlined_call_operand.hbm [shape: f32[1,128], index: 11, kind: input, shape index: {}]
  %s12 = inlined_call_operand.hbm [shape: bf16[128,128], index: 12, kind: input, shape index: {}]
  %s13 = inlined_call_operand.hbm [shape: f32[1,128], index: 13, kind: input, shape index: {}]
  %s14 = inlined_call_operand.hbm [shape: f32[8,8,128], index: 14, kind: output, shape index: {0}]
  %s15 = inlined_call_operand.hbm [shape: f32[8,16,128], index: 15, kind: output, shape index: {1}, may-alias: {9,15}]
  %16 = xla_tuple %s14, %s15
  %s17 = sld [smem:[#allocation0]]
  $region129: #{tpu_custom_call.1} parent=0
    _
  %s19 = ssub.s32 1, %s17
  %s20 = scalar_select 0, %s19, %s17
  $region1: #{tpu_custom_call.1} parent=0
    #allocation2 [shape = 'u8[32768]{0}', space=vmem, size = 0x8000, scoped, tag = 'input window, operand 0']
    #allocation3 [shape = 's32[2]{0}', space=sflag, size = 0x8, scoped, tag = 'scoped memory for tpu_custom_call.1']
    #allocation4 [shape = 's32[2]{0}', space=sflag, size = 0x8, scoped, tag = 'scoped memory for tpu_custom_call.1']
    #allocation5 [shape = 'u8[32768]{0}', space=vmem, size = 0x8000, scoped, tag = 'input window, operand 1, single buffered']
    #allocation6 [shape = 's32[1]{0}', space=sflag, size = 0x4, scoped, tag = 'scoped memory for tpu_custom_call.1']
    #allocation7 [shape = 'u8[32768]{0}', space=vmem, size = 0x8000, scoped, tag = 'input window, operand 3, single buffered']
    #allocation8 [shape = 'u8[65536]{0}', space=vmem, size = 0x10000, scoped, tag = 'input window, operand 9']
    #allocation9 [shape = 's32[2]{0}', space=sflag, size = 0x8, scoped, tag = 'scoped memory for tpu_custom_call.1']
    #allocation10 [shape = 'u8[32768]{0}', space=vmem, size = 0x8000, scoped, tag = 'input window, operand 10, single buffered']
    #allocation11 [shape = 'u8[512]{0}', space=vmem, size = 0x400, scoped, tag = 'input window, operand 11, single buffered']
    #allocation12 [shape = 's32[1]{0}', space=sflag, size = 0x4, scoped, tag = 'scoped memory for tpu_custom_call.1']
    #allocation13 [shape = 'u8[32768]{0}', space=vmem, size = 0x8000, scoped, tag = 'input window, operand 12, single buffered']
    #allocation14 [shape = 'u8[512]{0}', space=vmem, size = 0x400, scoped, tag = 'input window, operand 13, single buffered']
    #allocation15 [shape = 's32[1]{0}', space=sflag, size = 0x4, scoped, tag = 'scoped memory for tpu_custom_call.1']
    #allocation16 [shape = 'u8[32768]{0}', space=vmem, size = 0x8000, scoped, tag = 'output window, operand 0']
    #allocation17 [shape = 'u8[65536]{0}', space=vmem, size = 0x10000, scoped, tag = 'output window, operand 1']
    #allocation18 [shape = 's32[2]{0}', space=sflag, size = 0x8, scoped, tag = 'scoped memory for tpu_custom_call.1']
    %21 = vsyncpa [#allocation3], 0
    %s22 = scalar_lea.sflag [#allocation3], 1
    %23 = vsyncpa %s22, 0
    %24 = vsyncpa [#allocation6], 0
    %25 = vsyncpa [#allocation9], 0
    %s26 = scalar_lea.sflag [#allocation9], 1
    %27 = vsyncpa %s26, 0
    %28 = vsyncpa [#allocation12], 0
    %29 = vsyncpa [#allocation15], 0
    %30 = vsyncpa [#allocation4], 0
    %s31 = scalar_lea.sflag [#allocation4], 1
    %32 = vsyncpa %s31, 0
    %33 = vsyncpa [#allocation18], 0
    %s34 = scalar_lea.sflag [#allocation18], 1
    %35 = vsyncpa %s34, 0
    loop: start=0, step=1, limit=4
    $region2: #{tpu_custom_call.1} parent=1 // loop_pre_header
      _
    $region3: #{tpu_custom_call.1} parent=1 // loop_header
      %s37 = sphi 0, %s41
      %p38 = scmp.ge.s32.totalorder %s37, 4
      %s47 = sphi 0, %s49
      %s50 = sphi 0, %s47
      %s51 = sphi 0, %s50
      %s67 = sphi 0, %s51
      %s71 = sphi 0, %s71
      %s73 = sphi 0, %s71
      %s74 = sphi 0, %s73
      %s88 = sphi 0, %s74
      %s92 = sphi 0, %s92
      %s94 = sphi 0, %s92
      %s95 = sphi 0, %s94
      %s109 = sphi 0, %s95
      %s113 = sphi 0, %s113
      %s115 = sphi 0, %s113
      %s116 = sphi 0, %s115
      %s130 = sphi 0, %s116
      %s134 = sphi 0, %s134
      %s136 = sphi 0, %s134
      %s137 = sphi 0, %s136
      %s151 = sphi 0, %s137
      %s155 = sphi 0, %s155
      %s157 = sphi 0, %s155
      %s158 = sphi 0, %s157
      %s172 = sphi 0, %s158
      %s176 = sphi 0, %s176
      %s178 = sphi 0, %s176
      %s179 = sphi 0, %s178
      %s193 = sphi 0, %s179
      %s197 = sphi 0, %s197
      %s199 = sphi 0, %s197
      %s200 = sphi 0, %s199
      %s214 = sphi 0, %s200
      %s218 = sphi 0, %s218
      %s220 = sphi 0, %s218
      %s221 = sphi 0, %s220
      %s235 = sphi 0, %s221
      %s241 = sphi 0, %s243
      %s244 = sphi 0, %s241
      %s245 = sphi 0, %s244
      %s261 = sphi 0, %s245
      %s265 = sphi 0, %s265
      %s267 = sphi 0, %s265
      %s268 = sphi 0, %s267
      %s282 = sphi 0, %s268
      %s286 = sphi 0, %s286
      %s288 = sphi 0, %s286
      %s289 = sphi 0, %s288
      %s303 = sphi 0, %s289
      %s307 = sphi 0, %s307
      %s309 = sphi 0, %s307
      %s310 = sphi 0, %s309
      %s324 = sphi 0, %s310
      %s328 = sphi 0, %s328
      %s330 = sphi 0, %s328
      %s331 = sphi 0, %s330
      %s345 = sphi 0, %s331
      %s351 = sphi 0, %s353
      %s354 = sphi 0, %s351
      %s355 = sphi 0, %s354
      %s371 = sphi 0, %s355
      %s377 = sphi 0, %s379
      %s380 = sphi 0, %s377
      %s381 = sphi 0, %s380
      %s397 = sphi 0, %s381
    $region4: #{tpu_custom_call.1} parent=1 // loop_header_branch
      %40 = sbr.rel (%p38) target = $region8
    $region5: #{tpu_custom_call.1} parent=1 // loop_body
      %s42 = ssub.s32 %s37, 1
      %s43 = ssub.s32 %s37, 2
      %s44 = sadd.s32 %s37, 1
      %s45 = ssub.s32 %s37, %s44
      %p46 = scmp.eq.s32.totalorder %s45, 0
      %s48 = sadd.s32 %s47, 1
      %s49 = scalar_select %p46, %s47, %s48
      %p52 = pneg %p46
      %p53 = scmp.eq.s32.totalorder %s37, 1
      %p54 = por %p52, %p53
      %p55 = scmp.ne.s32.totalorder %s47, %s50
      %p56 = scmp.eq.s32.totalorder %s37, 0
      %p57 = por %p55, %p56
      %p58 = scmp.ne.s32.totalorder %s47, %s50
      %p59 = scmp.eq.s32.totalorder %s42, 1
      %p60 = por %p58, %p59
      %p61 = scmp.ne.s32.totalorder %s50, %s51
      %p62 = scmp.eq.s32.totalorder %s42, 0
      %p63 = por %p61, %p62
      %p64 = scmp.ne.s32.totalorder %s50, %s51
      %p65 = scmp.eq.s32.totalorder %s43, 1
      %p66 = por %p64, %p65
      %p68 = scmp.ne.s32.totalorder %s51, %s67
      %p69 = scmp.eq.s32.totalorder %s43, 0
      %p70 = por %p68, %p69
      %s72 = sadd.s32 %s71, 1
      %p75 = scmp.eq.s32.totalorder %s37, 1
      %p76 = scmp.ne.s32.totalorder %s71, %s73
      %p77 = scmp.eq.s32.totalorder %s37, 0
      %p78 = por %p76, %p77
      %p79 = scmp.ne.s32.totalorder %s71, %s73
      %p80 = scmp.eq.s32.totalorder %s42, 1
      %p81 = por %p79, %p80
      %p82 = scmp.ne.s32.totalorder %s73, %s74
      %p83 = scmp.eq.s32.totalorder %s42, 0
      %p84 = por %p82, %p83
      %p85 = scmp.ne.s32.totalorder %s73, %s74
      %p86 = scmp.eq.s32.totalorder %s43, 1
      %p87 = por %p85, %p86
      %p89 = scmp.ne.s32.totalorder %s74, %s88
      %p90 = scmp.eq.s32.totalorder %s43, 0
      %p91 = por %p89, %p90
      %s93 = sadd.s32 %s92, 1
      %p96 = scmp.eq.s32.totalorder %s37, 1
      %p97 = scmp.ne.s32.totalorder %s92, %s94
      %p98 = scmp.eq.s32.totalorder %s37, 0
      %p99 = por %p97, %p98
      %p100 = scmp.ne.s32.totalorder %s92, %s94
      %p101 = scmp.eq.s32.totalorder %s42, 1
      %p102 = por %p100, %p101
      %p103 = scmp.ne.s32.totalorder %s94, %s95
      %p104 = scmp.eq.s32.totalorder %s42, 0
      %p105 = por %p103, %p104
      %p106 = scmp.ne.s32.totalorder %s94, %s95
      %p107 = scmp.eq.s32.totalorder %s43, 1
      %p108 = por %p106, %p107
      %p110 = scmp.ne.s32.totalorder %s95, %s109
      %p111 = scmp.eq.s32.totalorder %s43, 0
      %p112 = por %p110, %p111
      %s114 = sadd.s32 %s113, 1
      %p117 = scmp.eq.s32.totalorder %s37, 1
      %p118 = scmp.ne.s32.totalorder %s113, %s115
      %p119 = scmp.eq.s32.totalorder %s37, 0
      %p120 = por %p118, %p119
      %p121 = scmp.ne.s32.totalorder %s113, %s115
      %p122 = scmp.eq.s32.totalorder %s42, 1
      %p123 = por %p121, %p122
      %p124 = scmp.ne.s32.totalorder %s115, %s116
      %p125 = scmp.eq.s32.totalorder %s42, 0
      %p126 = por %p124, %p125
      %p127 = scmp.ne.s32.totalorder %s115, %s116
      %p128 = scmp.eq.s32.totalorder %s43, 1
      %p129 = por %p127, %p128
      %p131 = scmp.ne.s32.totalorder %s116, %s130
      %p132 = scmp.eq.s32.totalorder %s43, 0
      %p133 = por %p131, %p132
      %s135 = sadd.s32 %s134, 1
      %p138 = scmp.eq.s32.totalorder %s37, 1
      %p139 = scmp.ne.s32.totalorder %s134, %s136
      %p140 = scmp.eq.s32.totalorder %s37, 0
      %p141 = por %p139, %p140
      %p142 = scmp.ne.s32.totalorder %s134, %s136
      %p143 = scmp.eq.s32.totalorder %s42, 1
      %p144 = por %p142, %p143
      %p145 = scmp.ne.s32.totalorder %s136, %s137
      %p146 = scmp.eq.s32.totalorder %s42, 0
      %p147 = por %p145, %p146
      %p148 = scmp.ne.s32.totalorder %s136, %s137
      %p149 = scmp.eq.s32.totalorder %s43, 1
      %p150 = por %p148, %p149
      %p152 = scmp.ne.s32.totalorder %s137, %s151
      %p153 = scmp.eq.s32.totalorder %s43, 0
      %p154 = por %p152, %p153
      %s156 = sadd.s32 %s155, 1
      %p159 = scmp.eq.s32.totalorder %s37, 1
      %p160 = scmp.ne.s32.totalorder %s155, %s157
      %p161 = scmp.eq.s32.totalorder %s37, 0
      %p162 = por %p160, %p161
      %p163 = scmp.ne.s32.totalorder %s155, %s157
      %p164 = scmp.eq.s32.totalorder %s42, 1
      %p165 = por %p163, %p164
      %p166 = scmp.ne.s32.totalorder %s157, %s158
      %p167 = scmp.eq.s32.totalorder %s42, 0
      %p168 = por %p166, %p167
      %p169 = scmp.ne.s32.totalorder %s157, %s158
      %p170 = scmp.eq.s32.totalorder %s43, 1
      %p171 = por %p169, %p170
      %p173 = scmp.ne.s32.totalorder %s158, %s172
      %p174 = scmp.eq.s32.totalorder %s43, 0
      %p175 = por %p173, %p174
      %s177 = sadd.s32 %s176, 1
      %p180 = scmp.eq.s32.totalorder %s37, 1
      %p181 = scmp.ne.s32.totalorder %s176, %s178
      %p182 = scmp.eq.s32.totalorder %s37, 0
      %p183 = por %p181, %p182
      %p184 = scmp.ne.s32.totalorder %s176, %s178
      %p185 = scmp.eq.s32.totalorder %s42, 1
      %p186 = por %p184, %p185
      %p187 = scmp.ne.s32.totalorder %s178, %s179
      %p188 = scmp.eq.s32.totalorder %s42, 0
      %p189 = por %p187, %p188
      %p190 = scmp.ne.s32.totalorder %s178, %s179
      %p191 = scmp.eq.s32.totalorder %s43, 1
      %p192 = por %p190, %p191
      %p194 = scmp.ne.s32.totalorder %s179, %s193
      %p195 = scmp.eq.s32.totalorder %s43, 0
      %p196 = por %p194, %p195
      %s198 = sadd.s32 %s197, 1
      %p201 = scmp.eq.s32.totalorder %s37, 1
      %p202 = scmp.ne.s32.totalorder %s197, %s199
      %p203 = scmp.eq.s32.totalorder %s37, 0
      %p204 = por %p202, %p203
      %p205 = scmp.ne.s32.totalorder %s197, %s199
      %p206 = scmp.eq.s32.totalorder %s42, 1
      %p207 = por %p205, %p206
      %p208 = scmp.ne.s32.totalorder %s199, %s200
      %p209 = scmp.eq.s32.totalorder %s42, 0
      %p210 = por %p208, %p209
      %p211 = scmp.ne.s32.totalorder %s199, %s200
      %p212 = scmp.eq.s32.totalorder %s43, 1
      %p213 = por %p211, %p212
      %p215 = scmp.ne.s32.totalorder %s200, %s214
      %p216 = scmp.eq.s32.totalorder %s43, 0
      %p217 = por %p215, %p216
      %s219 = sadd.s32 %s218, 1
      %p222 = scmp.eq.s32.totalorder %s37, 1
      %p223 = scmp.ne.s32.totalorder %s218, %s220
      %p224 = scmp.eq.s32.totalorder %s37, 0
      %p225 = por %p223, %p224
      %p226 = scmp.ne.s32.totalorder %s218, %s220
      %p227 = scmp.eq.s32.totalorder %s42, 1
      %p228 = por %p226, %p227
      %p229 = scmp.ne.s32.totalorder %s220, %s221
      %p230 = scmp.eq.s32.totalorder %s42, 0
      %p231 = por %p229, %p230
      %p232 = scmp.ne.s32.totalorder %s220, %s221
      %p233 = scmp.eq.s32.totalorder %s43, 1
      %p234 = por %p232, %p233
      %p236 = scmp.ne.s32.totalorder %s221, %s235
      %p237 = scmp.eq.s32.totalorder %s43, 0
      %p238 = por %p236, %p237
      %s239 = ssub.s32 %s37, %s44
      %p240 = scmp.eq.s32.totalorder %s239, 0
      %s242 = sadd.s32 %s241, 1
      %s243 = scalar_select %p240, %s241, %s242
      %p246 = pneg %p240
      %p247 = scmp.eq.s32.totalorder %s37, 1
      %p248 = por %p246, %p247
      %p249 = scmp.ne.s32.totalorder %s241, %s244
      %p250 = scmp.eq.s32.totalorder %s37, 0
      %p251 = por %p249, %p250
      %p252 = scmp.ne.s32.totalorder %s241, %s244
      %p253 = scmp.eq.s32.totalorder %s42, 1
      %p254 = por %p252, %p253
      %p255 = scmp.ne.s32.totalorder %s244, %s245
      %p256 = scmp.eq.s32.totalorder %s42, 0
      %p257 = por %p255, %p256
      %p258 = scmp.ne.s32.totalorder %s244, %s245
      %p259 = scmp.eq.s32.totalorder %s43, 1
      %p260 = por %p258, %p259
      %p262 = scmp.ne.s32.totalorder %s245, %s261
      %p263 = scmp.eq.s32.totalorder %s43, 0
      %p264 = por %p262, %p263
      %s266 = sadd.s32 %s265, 1
      %p269 = scmp.eq.s32.totalorder %s37, 1
      %p270 = scmp.ne.s32.totalorder %s265, %s267
      %p271 = scmp.eq.s32.totalorder %s37, 0
      %p272 = por %p270, %p271
      %p273 = scmp.ne.s32.totalorder %s265, %s267
      %p274 = scmp.eq.s32.totalorder %s42, 1
      %p275 = por %p273, %p274
      %p276 = scmp.ne.s32.totalorder %s267, %s268
      %p277 = scmp.eq.s32.totalorder %s42, 0
      %p278 = por %p276, %p277
      %p279 = scmp.ne.s32.totalorder %s267, %s268
      %p280 = scmp.eq.s32.totalorder %s43, 1
      %p281 = por %p279, %p280
      %p283 = scmp.ne.s32.totalorder %s268, %s282
      %p284 = scmp.eq.s32.totalorder %s43, 0
      %p285 = por %p283, %p284
      %s287 = sadd.s32 %s286, 1
      %p290 = scmp.eq.s32.totalorder %s37, 1
      %p291 = scmp.ne.s32.totalorder %s286, %s288
      %p292 = scmp.eq.s32.totalorder %s37, 0
      %p293 = por %p291, %p292
      %p294 = scmp.ne.s32.totalorder %s286, %s288
      %p295 = scmp.eq.s32.totalorder %s42, 1
      %p296 = por %p294, %p295
      %p297 = scmp.ne.s32.totalorder %s288, %s289
      %p298 = scmp.eq.s32.totalorder %s42, 0
      %p299 = por %p297, %p298
      %p300 = scmp.ne.s32.totalorder %s288, %s289
      %p301 = scmp.eq.s32.totalorder %s43, 1
      %p302 = por %p300, %p301
      %p304 = scmp.ne.s32.totalorder %s289, %s303
      %p305 = scmp.eq.s32.totalorder %s43, 0
      %p306 = por %p304, %p305
      %s308 = sadd.s32 %s307, 1
      %p311 = scmp.eq.s32.totalorder %s37, 1
      %p312 = scmp.ne.s32.totalorder %s307, %s309
      %p313 = scmp.eq.s32.totalorder %s37, 0
      %p314 = por %p312, %p313
      %p315 = scmp.ne.s32.totalorder %s307, %s309
      %p316 = scmp.eq.s32.totalorder %s42, 1
      %p317 = por %p315, %p316
      %p318 = scmp.ne.s32.totalorder %s309, %s310
      %p319 = scmp.eq.s32.totalorder %s42, 0
      %p320 = por %p318, %p319
      %p321 = scmp.ne.s32.totalorder %s309, %s310
      %p322 = scmp.eq.s32.totalorder %s43, 1
      %p323 = por %p321, %p322
      %p325 = scmp.ne.s32.totalorder %s310, %s324
      %p326 = scmp.eq.s32.totalorder %s43, 0
      %p327 = por %p325, %p326
      %s329 = sadd.s32 %s328, 1
      %p332 = scmp.eq.s32.totalorder %s37, 1
      %p333 = scmp.ne.s32.totalorder %s328, %s330
      %p334 = scmp.eq.s32.totalorder %s37, 0
      %p335 = por %p333, %p334
      %p336 = scmp.ne.s32.totalorder %s328, %s330
      %p337 = scmp.eq.s32.totalorder %s42, 1
      %p338 = por %p336, %p337
      %p339 = scmp.ne.s32.totalorder %s330, %s331
      %p340 = scmp.eq.s32.totalorder %s42, 0
      %p341 = por %p339, %p340
      %p342 = scmp.ne.s32.totalorder %s330, %s331
      %p343 = scmp.eq.s32.totalorder %s43, 1
      %p344 = por %p342, %p343
      %p346 = scmp.ne.s32.totalorder %s331, %s345
      %p347 = scmp.eq.s32.totalorder %s43, 0
      %p348 = por %p346, %p347
      %s349 = ssub.s32 %s37, %s44
      %p350 = scmp.eq.s32.totalorder %s349, 0
      %s352 = sadd.s32 %s351, 1
      %s353 = scalar_select %p350, %s351, %s352
      %p356 = pneg %p350
      %p357 = scmp.eq.s32.totalorder %s37, 1
      %p358 = por %p356, %p357
      %p359 = scmp.ne.s32.totalorder %s351, %s354
      %p360 = scmp.eq.s32.totalorder %s37, 0
      %p361 = por %p359, %p360
      %p362 = scmp.ne.s32.totalorder %s351, %s354
      %p363 = scmp.eq.s32.totalorder %s42, 1
      %p364 = por %p362, %p363
      %p365 = scmp.ne.s32.totalorder %s354, %s355
      %p366 = scmp.eq.s32.totalorder %s42, 0
      %p367 = por %p365, %p366
      %p368 = scmp.ne.s32.totalorder %s354, %s355
      %p369 = scmp.eq.s32.totalorder %s43, 1
      %p370 = por %p368, %p369
      %p372 = scmp.ne.s32.totalorder %s355, %s371
      %p373 = scmp.eq.s32.totalorder %s43, 0
      %p374 = por %p372, %p373
      %s375 = ssub.s32 %s37, %s44
      %p376 = scmp.eq.s32.totalorder %s375, 0
      %s378 = sadd.s32 %s377, 1
      %s379 = scalar_select %p376, %s377, %s378
      %p382 = pneg %p376
      %p383 = scmp.eq.s32.totalorder %s37, 1
      %p384 = por %p382, %p383
      %p385 = scmp.ne.s32.totalorder %s377, %s380
      %p386 = scmp.eq.s32.totalorder %s37, 0
      %p387 = por %p385, %p386
      %p388 = scmp.ne.s32.totalorder %s377, %s380
      %p389 = scmp.eq.s32.totalorder %s42, 1
      %p390 = por %p388, %p389
      %p391 = scmp.ne.s32.totalorder %s380, %s381
      %p392 = scmp.eq.s32.totalorder %s42, 0
      %p393 = por %p391, %p392
      %p394 = scmp.ne.s32.totalorder %s380, %s381
      %p395 = scmp.eq.s32.totalorder %s43, 1
      %p396 = por %p394, %p395
      %p398 = scmp.ne.s32.totalorder %s381, %s397
      %p399 = scmp.eq.s32.totalorder %s43, 0
      %p400 = por %p398, %p399
      %p401 = scmp.le.s32.totalorder 1, %s37
      %p402 = scmp.lt.s32.totalorder %s37, 3
      %p403 = pnand %p401, %p402
      %p404 = pneg %p403
      // Predicated region
      $region9: #{tpu_custom_call.1} parent=5 // pred_check
        _
      $region10: #{tpu_custom_call.1} parent=5 // pred_check_branch
        %406 = sbr.rel (%p403) target = $region12
      $region11: #{tpu_custom_call.1} parent=5 // pred_region
        %s407 = ssub.s32 %s37, 1
        // Predicated region
        $region13: #{tpu_custom_call.1} parent=11 // pred_check
          %p408 = pneg %p84
        $region14: #{tpu_custom_call.1} parent=11 // pred_check_branch
          %410 = sbr.rel (%p408) target = $region16
        $region15: #{tpu_custom_call.1} parent=11 // pred_region
          %s412 = ssub.s32 1024, 1024
          %413 = vsyncadd [#allocation6], %s412
          %s414 = sshll.u32 [#allocation5], 4
          %s415 = int_to_ptr.vmem [resolvable:$true] %s414
          %420 = dma.hbm_to_vmem [thread:$0]  %s1, 1024, %s415, [#allocation6], 64, 64, 4
        $region16: #{tpu_custom_call.1} parent=11 // pred_fallthru
          _
        // Predicated region
        $region17: #{tpu_custom_call.1} parent=11 // pred_check
          %p421 = pneg %p105
        $region18: #{tpu_custom_call.1} parent=11 // pred_check_branch
          %423 = sbr.rel (%p421) target = $region20
        $region19: #{tpu_custom_call.1} parent=11 // pred_region
          _
        $region20: #{tpu_custom_call.1} parent=11 // pred_fallthru
          _
        // Predicated region
        $region21: #{tpu_custom_call.1} parent=11 // pred_check
          %p424 = pneg %p126
        $region22: #{tpu_custom_call.1} parent=11 // pred_check_branch
          %426 = sbr.rel (%p424) target = $region24
        $region23: #{tpu_custom_call.1} parent=11 // pred_region
          %s428 = ssub.s32 1024, 1024
          %429 = vsyncadd [#allocation6], %s428
          %s430 = sshll.u32 [#allocation7], 4
          %s431 = int_to_ptr.vmem [resolvable:$true] %s430
          %436 = dma.hbm_to_vmem [thread:$0]  %s3, 1024, %s431, [#allocation6], 64, 64, 4
        $region24: #{tpu_custom_call.1} parent=11 // pred_fallthru
          _
        // Predicated region
        $region25: #{tpu_custom_call.1} parent=11 // pred_check
          %p437 = pneg %p147
        $region26: #{tpu_custom_call.1} parent=11 // pred_check_branch
          %439 = sbr.rel (%p437) target = $region28
        $region27: #{tpu_custom_call.1} parent=11 // pred_region
          _
        $region28: #{tpu_custom_call.1} parent=11 // pred_fallthru
          _
        // Predicated region
        $region29: #{tpu_custom_call.1} parent=11 // pred_check
          %p440 = pneg %p168
        $region30: #{tpu_custom_call.1} parent=11 // pred_check_branch
          %442 = sbr.rel (%p440) target = $region32
        $region31: #{tpu_custom_call.1} parent=11 // pred_region
          _
        $region32: #{tpu_custom_call.1} parent=11 // pred_fallthru
          _
        // Predicated region
        $region33: #{tpu_custom_call.1} parent=11 // pred_check
          %p443 = pneg %p189
        $region34: #{tpu_custom_call.1} parent=11 // pred_check_branch
          %445 = sbr.rel (%p443) target = $region36
        $region35: #{tpu_custom_call.1} parent=11 // pred_region
          _
        $region36: #{tpu_custom_call.1} parent=11 // pred_fallthru
          _
        // Predicated region
        $region37: #{tpu_custom_call.1} parent=11 // pred_check
          %p446 = pneg %p210
        $region38: #{tpu_custom_call.1} parent=11 // pred_check_branch
          %448 = sbr.rel (%p446) target = $region40
        $region39: #{tpu_custom_call.1} parent=11 // pred_region
          _
        $region40: #{tpu_custom_call.1} parent=11 // pred_fallthru
          _
        // Predicated region
        $region41: #{tpu_custom_call.1} parent=11 // pred_check
          %p449 = pneg %p231
        $region42: #{tpu_custom_call.1} parent=11 // pred_check_branch
          %451 = sbr.rel (%p449) target = $region44
        $region43: #{tpu_custom_call.1} parent=11 // pred_region
          _
        $region44: #{tpu_custom_call.1} parent=11 // pred_fallthru
          _
        // Predicated region
        $region45: #{tpu_custom_call.1} parent=11 // pred_check
          %p452 = pneg %p278
        $region46: #{tpu_custom_call.1} parent=11 // pred_check_branch
          %454 = sbr.rel (%p452) target = $region48
        $region47: #{tpu_custom_call.1} parent=11 // pred_region
          %s456 = ssub.s32 1024, 1024
          %457 = vsyncadd [#allocation9], %s456
          %s458 = sshll.u32 [#allocation10], 4
          %s459 = int_to_ptr.vmem [resolvable:$true] %s458
          %464 = dma.hbm_to_vmem [thread:$0]  %s10, 1024, %s459, [#allocation9], 64, 64, 4
        $region48: #{tpu_custom_call.1} parent=11 // pred_fallthru
          _
        // Predicated region
        $region49: #{tpu_custom_call.1} parent=11 // pred_check
          %p465 = pneg %p299
        $region50: #{tpu_custom_call.1} parent=11 // pred_check_branch
          %467 = sbr.rel (%p465) target = $region52
        $region51: #{tpu_custom_call.1} parent=11 // pred_region
          %s469 = ssub.s32 16, 16
          %470 = vsyncadd [#allocation12], %s469
          %s472 = sshll.u32 [#allocation11], 4
          %s473 = int_to_ptr.vmem [resolvable:$true] %s472
          %475 = dma.hbm_to_vmem [thread:$0]  %s11, 16, %s473, [#allocation12]
        $region52: #{tpu_custom_call.1} parent=11 // pred_fallthru
          _
        // Predicated region
        $region53: #{tpu_custom_call.1} parent=11 // pred_check
          %p476 = pneg %p320
        $region54: #{tpu_custom_call.1} parent=11 // pred_check_branch
          %478 = sbr.rel (%p476) target = $region56
        $region55: #{tpu_custom_call.1} parent=11 // pred_region
          %s480 = ssub.s32 1024, 1024
          %481 = vsyncadd [#allocation12], %s480
          %s482 = sshll.u32 [#allocation13], 4
          %s483 = int_to_ptr.vmem [resolvable:$true] %s482
          %488 = dma.hbm_to_vmem [thread:$0]  %s12, 1024, %s483, [#allocation12], 64, 64, 4
        $region56: #{tpu_custom_call.1} parent=11 // pred_fallthru
          _
        // Predicated region
        $region57: #{tpu_custom_call.1} parent=11 // pred_check
          %p489 = pneg %p341
        $region58: #{tpu_custom_call.1} parent=11 // pred_check_branch
          %491 = sbr.rel (%p489) target = $region60
        $region59: #{tpu_custom_call.1} parent=11 // pred_region
          %s493 = ssub.s32 16, 16
          %494 = vsyncadd [#allocation15], %s493
          %s496 = sshll.u32 [#allocation14], 4
          %s497 = int_to_ptr.vmem [resolvable:$true] %s496
          %499 = dma.hbm_to_vmem [thread:$0]  %s13, 16, %s497, [#allocation15]
        $region60: #{tpu_custom_call.1} parent=11 // pred_fallthru
          _
      $region12: #{tpu_custom_call.1} parent=5 // pred_fallthru
        _
      %p500 = scmp.lt.s32.totalorder %s37, 2
      // Predicated region
      $region61: #{tpu_custom_call.1} parent=5 // pred_check
        %p501 = pneg %p500
      $region62: #{tpu_custom_call.1} parent=5 // pred_check_branch
        %503 = sbr.rel (%p501) target = $region64
      $region63: #{tpu_custom_call.1} parent=5 // pred_region
        // Predicated region
        $region65: #{tpu_custom_call.1} parent=63 // pred_check
          %p504 = pneg %p57
        $region66: #{tpu_custom_call.1} parent=63 // pred_check_branch
          %506 = sbr.rel (%p504) target = $region68
        $region67: #{tpu_custom_call.1} parent=63 // pred_region
          %s507 = sand.u32 %s47, 1
          %s508 = scalar_lea.sflag [#allocation3], %s507
          %s509 = sand.u32 %s47, 1
          %s510 = smul.addr %s509, 32
          %s511 = scalar_lea.vmem [#allocation2], %s510
          %s512 = smul.u32 4, %s37
          %s514 = ssub.s32 512, 512
          %515 = vsyncadd %s508, %s514
          %s516 = smul.addr %s512, 128
          %s517 = scalar_lea.hbm %s0, %s516
          %s518 = sshll.u32 %s511, 4
          %s519 = int_to_ptr.vmem [resolvable:$true] %s518
          %524 = dma.hbm_to_vmem [thread:$0]  %s517, 512, %s519, %s508, 128, 128, 8
        $region68: #{tpu_custom_call.1} parent=63 // pred_fallthru
          _
        // Predicated region
        $region69: #{tpu_custom_call.1} parent=63 // pred_check
          %p525 = pneg %p251
        $region70: #{tpu_custom_call.1} parent=63 // pred_check_branch
          %527 = sbr.rel (%p525) target = $region72
        $region71: #{tpu_custom_call.1} parent=63 // pred_region
          %s528 = sand.u32 %s37, 1
          %s529 = scalar_lea.sflag [#allocation9], %s528
          %s530 = sand.u32 %s241, 1
          %s531 = smul.addr %s530, 64
          %s532 = scalar_lea.vmem [#allocation8], %s531
          %s533 = smul.u32 4, %s37
          %s535 = ssub.s32 1024, 1024
          %536 = vsyncadd %s529, %s535
          %s537 = smul.addr %s533, 2
          %s538 = smul.addr %s537, 128
          %s539 = scalar_lea.hbm %s9, %s538
          %s540 = sshll.u32 %s532, 4
          %s541 = int_to_ptr.vmem [resolvable:$true] %s540
          %546 = dma.hbm_to_vmem [thread:$0]  %s539, 1024, %s541, %s529, 128, 128, 8
        $region72: #{tpu_custom_call.1} parent=63 // pred_fallthru
          _
      $region64: #{tpu_custom_call.1} parent=5 // pred_fallthru
        _
      %p547 = scmp.le.s32.totalorder 1, %s37
      %p548 = scmp.lt.s32.totalorder %s37, 3
      %p549 = pnand %p547, %p548
      %p550 = pneg %p549
      // Predicated region
      $region73: #{tpu_custom_call.1} parent=5 // pred_check
        _
      $region74: #{tpu_custom_call.1} parent=5 // pred_check_branch
        %552 = sbr.rel (%p549) target = $region76
      $region75: #{tpu_custom_call.1} parent=5 // pred_region
        %s553 = ssub.s32 %s37, 1
        %s554 = sand.u32 %s50, 1
        %s555 = scalar_lea.sflag [#allocation3], %s554
        %s556 = sand.u32 %s50, 1
        %s557 = smul.addr %s556, 32
        %s558 = scalar_lea.vmem [#allocation2], %s557
        // Predicated region
        $region77: #{tpu_custom_call.1} parent=75 // pred_check
          %p559 = pneg %p63
        $region78: #{tpu_custom_call.1} parent=75 // pred_check_branch
          %561 = sbr.rel (%p559) target = $region80
        $region79: #{tpu_custom_call.1} parent=75 // pred_region
          %562 = dma.done %s555, 512
        $region80: #{tpu_custom_call.1} parent=75 // pred_fallthru
          _
        // Predicated region
        $region81: #{tpu_custom_call.1} parent=75 // pred_check
          %p563 = pneg %p84
        $region82: #{tpu_custom_call.1} parent=75 // pred_check_branch
          %565 = sbr.rel (%p563) target = $region84
        $region83: #{tpu_custom_call.1} parent=75 // pred_region
          %566 = dma.done [#allocation6], 1024
        $region84: #{tpu_custom_call.1} parent=75 // pred_fallthru
          _
        // Predicated region
        $region85: #{tpu_custom_call.1} parent=75 // pred_check
          %p567 = pneg %p126
        $region86: #{tpu_custom_call.1} parent=75 // pred_check_branch
          %569 = sbr.rel (%p567) target = $region88
        $region87: #{tpu_custom_call.1} parent=75 // pred_region
          %570 = dma.done [#allocation6], 1024
        $region88: #{tpu_custom_call.1} parent=75 // pred_fallthru
          _
        %s571 = sand.u32 %s42, 1
        %s572 = scalar_lea.sflag [#allocation9], %s571
        %s573 = sand.u32 %s244, 1
        %s574 = smul.addr %s573, 64
        %s575 = scalar_lea.vmem [#allocation8], %s574
        // Predicated region
        $region89: #{tpu_custom_call.1} parent=75 // pred_check
          %p576 = pneg %p257
        $region90: #{tpu_custom_call.1} parent=75 // pred_check_branch
          %578 = sbr.rel (%p576) target = $region92
        $region91: #{tpu_custom_call.1} parent=75 // pred_region
          %579 = dma.done %s572, 1024
        $region92: #{tpu_custom_call.1} parent=75 // pred_fallthru
          _
        // Predicated region
        $region93: #{tpu_custom_call.1} parent=75 // pred_check
          %p580 = pneg %p278
        $region94: #{tpu_custom_call.1} parent=75 // pred_check_branch
          %582 = sbr.rel (%p580) target = $region96
        $region95: #{tpu_custom_call.1} parent=75 // pred_region
          %583 = dma.done [#allocation9], 1024
        $region96: #{tpu_custom_call.1} parent=75 // pred_fallthru
          _
        // Predicated region
        $region97: #{tpu_custom_call.1} parent=75 // pred_check
          %p584 = pneg %p299
        $region98: #{tpu_custom_call.1} parent=75 // pred_check_branch
          %586 = sbr.rel (%p584) target = $region100
        $region99: #{tpu_custom_call.1} parent=75 // pred_region
          %587 = dma.done [#allocation12], 16
        $region100: #{tpu_custom_call.1} parent=75 // pred_fallthru
          _
        // Predicated region
        $region101: #{tpu_custom_call.1} parent=75 // pred_check
          %p588 = pneg %p320
        $region102: #{tpu_custom_call.1} parent=75 // pred_check_branch
          %590 = sbr.rel (%p588) target = $region104
        $region103: #{tpu_custom_call.1} parent=75 // pred_region
          %591 = dma.done [#allocation12], 1024
        $region104: #{tpu_custom_call.1} parent=75 // pred_fallthru
          _
        // Predicated region
        $region105: #{tpu_custom_call.1} parent=75 // pred_check
          %p592 = pneg %p341
        $region106: #{tpu_custom_call.1} parent=75 // pred_check_branch
          %594 = sbr.rel (%p592) target = $region108
        $region107: #{tpu_custom_call.1} parent=75 // pred_region
          %595 = dma.done [#allocation15], 16
        $region108: #{tpu_custom_call.1} parent=75 // pred_fallthru
          _
        %s596 = sand.u32 %s50, 1
        %s597 = scalar_lea.sflag [#allocation3], %s596
        %s598 = sand.u32 %s50, 1
        %s599 = smul.addr %s598, 32
        %s600 = scalar_lea.vmem [#allocation2], %s599
        %p601 = pneg %p63
        %p602 = pneg %p60
        %p603 = pneg %p84
        %p604 = pneg %p81
        %p605 = pneg %p105
        %p606 = pneg %p102
        %p607 = pneg %p126
        %p608 = pneg %p123
        %p609 = pneg %p147
        %p610 = pneg %p144
        %p611 = pneg %p168
        %p612 = pneg %p165
        %p613 = pneg %p189
        %p614 = pneg %p186
        %p615 = pneg %p210
        %p616 = pneg %p207
        %p617 = pneg %p231
        %p618 = pneg %p228
        %s619 = sand.u32 %s42, 1
        %s620 = scalar_lea.sflag [#allocation9], %s619
        %s621 = sand.u32 %s244, 1
        %s622 = smul.addr %s621, 64
        %s623 = scalar_lea.vmem [#allocation8], %s622
        %p624 = pneg %p257
        %p625 = pneg %p254
        %p626 = pneg %p278
        %p627 = pneg %p275
        %p628 = pneg %p299
        %p629 = pneg %p296
        %p630 = pneg %p320
        %p631 = pneg %p317
        %p632 = pneg %p341
        %p633 = pneg %p338
        %p634 = pneg %p367
        %p635 = pneg %p364
        %s636 = sand.u32 %s354, 1
        %s637 = scalar_lea.sflag [#allocation4], %s636
        %s638 = sand.u32 %s354, 1
        %s639 = smul.addr %s638, 32
        %s640 = scalar_lea.vmem [#allocation16], %s639
        %p641 = pneg %p393
        %p642 = pneg %p390
        %s643 = sand.u32 %s380, 1
        %s644 = scalar_lea.sflag [#allocation18], %s643
        %s645 = sand.u32 %s380, 1
        %s646 = smul.addr %s645, 64
        %s647 = scalar_lea.vmem [#allocation17], %s646
        %s648 = smul.u32 4, %s42
        %s649 = smul.u32 4, %s42
        %s650 = smul.u32 4, %s42
        %s651 = smul.u32 4, %s42
        %v653 = vld [vmem:[%s558] sm:$0xff]
        %v654 = vld [vmem:[%s558 + $0x8] sm:$0xff]
        %v655 = vld [vmem:[%s558 + $0x10] sm:$0xff]
        %v656 = vld [vmem:[%s558 + $0x18] sm:$0xff]
        %v657 = vpack.c.bf16 %v654, %v653
        %v658 = vpack.c.bf16 %v656, %v655
        %v659 = vld [vmem:[#allocation5] sm:$0xf]
        %v660 = vld [vmem:[#allocation5 + $0x4] sm:$0xf]
        %v661 = vld [vmem:[#allocation5 + $0x8] sm:$0xf]
        %v662 = vld [vmem:[#allocation5 + $0xc] sm:$0xf]
        %v663 = vld [vmem:[#allocation5 + $0x10] sm:$0xf]
        %v664 = vld [vmem:[#allocation5 + $0x14] sm:$0xf]
        %v665 = vld [vmem:[#allocation5 + $0x18] sm:$0xf]
        %v666 = vld [vmem:[#allocation5 + $0x1c] sm:$0xf]
        %v667 = vld [vmem:[#allocation5 + $0x20] sm:$0xf]
        %v668 = vld [vmem:[#allocation5 + $0x24] sm:$0xf]
        %v669 = vld [vmem:[#allocation5 + $0x28] sm:$0xf]
        %v670 = vld [vmem:[#allocation5 + $0x2c] sm:$0xf]
        %v671 = vld [vmem:[#allocation5 + $0x30] sm:$0xf]
        %v672 = vld [vmem:[#allocation5 + $0x34] sm:$0xf]
        %v673 = vld [vmem:[#allocation5 + $0x38] sm:$0xf]
        %v674 = vld [vmem:[#allocation5 + $0x3c] sm:$0xf]
        %v675 = vld [vmem:[%s2] sm:$0x1]
        %v677 = vlaneseq
        %v678 = vshrl.u32 %v677, 7
        %v679 = vsub.s32 0, %v678
        %v680 = vrot.slane %v675, %v679
        %v698 = vunpack.c.l.b16 %v659
        %v699 = vunpack.c.l.b16 %v660
        %v700 = vunpack.c.l.b16 %v661
        %v701 = vunpack.c.l.b16 %v662
        %v702 = vunpack.c.l.b16 %v663
        %v703 = vunpack.c.l.b16 %v664
        %v704 = vunpack.c.l.b16 %v665
        %v705 = vunpack.c.l.b16 %v666
        %v706 = vunpack.c.l.b16 %v667
        %v707 = vunpack.c.l.b16 %v668
        %v708 = vunpack.c.l.b16 %v669
        %v709 = vunpack.c.l.b16 %v670
        %v710 = vunpack.c.l.b16 %v671
        %v711 = vunpack.c.l.b16 %v672
        %v712 = vunpack.c.l.b16 %v673
        %v713 = vunpack.c.l.b16 %v674
        %v714 = vpack.c.b16 %v699, %v698
        %v715 = vpack.c.b16 %v701, %v700
        %v716 = vpack.c.b16 %v703, %v702
        %v717 = vpack.c.b16 %v705, %v704
        %v718 = vpack.c.b16 %v707, %v706
        %v719 = vpack.c.b16 %v709, %v708
        %v720 = vpack.c.b16 %v711, %v710
        %v721 = vpack.c.b16 %v713, %v712
        %730 = vmatprep.subr.bf16.mxu0 0
        %731 = vmatpush1.bf16.msra.mxu0 %v721
        %732 = vmatprep.subr.bf16.mxu0 0
        %733 = vmatpush1.bf16.msra.mxu0 %v720
        %734 = vmatprep.subr.bf16.mxu0 0
        %735 = vmatpush1.bf16.msra.mxu0 %v719
        %736 = vmatprep.subr.bf16.mxu0 0
        %737 = vmatpush1.bf16.msra.mxu0 %v718
        %738 = vmatprep.subr.bf16.mxu0 0
        %739 = vmatpush1.bf16.msra.mxu0 %v717
        %740 = vmatprep.subr.bf16.mxu0 0
        %741 = vmatpush1.bf16.msra.mxu0 %v716
        %742 = vmatprep.subr.bf16.mxu0 0
        %743 = vmatpush1.bf16.msra.mxu0 %v715
        %744 = vmatprep.subr.bf16.mxu0 0
        %745 = vmatpush1.bf16.msra.mxu0 %v714
        %746 = vmatprep.subr.bf16.mxu0 0
        %747 = vmatpush2.bf16.msra.mxu0 0
        %748 = vmatprep.subr.bf16.mxu0 0
        %749 = vmatpush2.bf16.msra.mxu0 0
        %750 = vmatprep.subr.bf16.mxu0 0
        %751 = vmatpush2.bf16.msra.mxu0 0
        %752 = vmatprep.subr.bf16.mxu0 0
        %753 = vmatpush2.bf16.msra.mxu0 0
        %754 = vmatprep.subr.bf16.mxu0 0
        %755 = vmatpush2.bf16.msra.mxu0 0
        %756 = vmatprep.subr.bf16.mxu0 0
        %757 = vmatpush2.bf16.msra.mxu0 0
        %758 = vmatprep.subr.bf16.mxu0 0
        %759 = vmatpush2.bf16.msra.mxu0 0
        %760 = vmatprep.subr.bf16.mxu0 0
        %761 = vmatpush2.bf16.msra.mxu0 0
        %762 = vmatprep.mubr.bf16.mxu0 0
        %763 = vmatmul.mubr.bf16.gmra.mxu0 %v657
        %v764 = vpop.f32.mrf.mxu0
        %v765 = vadd.f32 %v680, %v764
        %v766 = vpop.f32.mrf.mxu0
        %v767 = vpop.f32.mrf.mxu0
        %v768 = vadd.f32 %v680, %v767
        %v769 = vpop.f32.mrf.mxu0
        %770 = vmatprep.mubr.bf16.mxu0 0
        %771 = vmatmul.mubr.bf16.gmra.mxu0 %v658
        %v772 = vpop.f32.mrf.mxu0
        %v773 = vadd.f32 %v680, %v772
        %v774 = vpop.f32.mrf.mxu0
        %v775 = vpop.f32.mrf.mxu0
        %v776 = vadd.f32 %v680, %v775
        %v777 = vpop.f32.mrf.mxu0
        %778 = vdwg.mxu0
        %v779 = vpack.c.bf16 %v768, %v765
        %v780 = vpack.c.bf16 %v776, %v773
        %v781 = vld [vmem:[#allocation7] sm:$0xf]
        %v782 = vld [vmem:[#allocation7 + $0x4] sm:$0xf]
        %v783 = vld [vmem:[#allocation7 + $0x8] sm:$0xf]
        %v784 = vld [vmem:[#allocation7 + $0xc] sm:$0xf]
        %v785 = vld [vmem:[#allocation7 + $0x10] sm:$0xf]
        %v786 = vld [vmem:[#allocation7 + $0x14] sm:$0xf]
        %v787 = vld [vmem:[#allocation7 + $0x18] sm:$0xf]
        %v788 = vld [vmem:[#allocation7 + $0x1c] sm:$0xf]
        %v789 = vld [vmem:[#allocation7 + $0x20] sm:$0xf]
        %v790 = vld [vmem:[#allocation7 + $0x24] sm:$0xf]
        %v791 = vld [vmem:[#allocation7 + $0x28] sm:$0xf]
        %v792 = vld [vmem:[#allocation7 + $0x2c] sm:$0xf]
        %v793 = vld [vmem:[#allocation7 + $0x30] sm:$0xf]
        %v794 = vld [vmem:[#allocation7 + $0x34] sm:$0xf]
        %v795 = vld [vmem:[#allocation7 + $0x38] sm:$0xf]
        %v796 = vld [vmem:[#allocation7 + $0x3c] sm:$0xf]
        %v797 = vld [vmem:[%s4] sm:$0x1]
        %v799 = vlaneseq
        %v800 = vshrl.u32 %v799, 7
        %v801 = vsub.s32 0, %v800
        %v802 = vrot.slane %v797, %v801
        %v820 = vunpack.c.l.b16 %v781
        %v821 = vunpack.c.l.b16 %v782
        %v822 = vunpack.c.l.b16 %v783
        %v823 = vunpack.c.l.b16 %v784
        %v824 = vunpack.c.l.b16 %v785
        %v825 = vunpack.c.l.b16 %v786
        %v826 = vunpack.c.l.b16 %v787
        %v827 = vunpack.c.l.b16 %v788
        %v828 = vunpack.c.l.b16 %v789
        %v829 = vunpack.c.l.b16 %v790
        %v830 = vunpack.c.l.b16 %v791
        %v831 = vunpack.c.l.b16 %v792
        %v832 = vunpack.c.l.b16 %v793
        %v833 = vunpack.c.l.b16 %v794
        %v834 = vunpack.c.l.b16 %v795
        %v835 = vunpack.c.l.b16 %v796
        %v836 = vpack.c.b16 %v821, %v820
        %v837 = vpack.c.b16 %v823, %v822
        %v838 = vpack.c.b16 %v825, %v824
        %v839 = vpack.c.b16 %v827, %v826
        %v840 = vpack.c.b16 %v829, %v828
        %v841 = vpack.c.b16 %v831, %v830
        %v842 = vpack.c.b16 %v833, %v832
        %v843 = vpack.c.b16 %v835, %v834
        %852 = vmatprep.subr.bf16.mxu0 0
        %853 = vmatpush1.bf16.msra.mxu0 %v843
        %854 = vmatprep.subr.bf16.mxu0 0
        %855 = vmatpush1.bf16.msra.mxu0 %v842
        %856 = vmatprep.subr.bf16.mxu0 0
        %857 = vmatpush1.bf16.msra.mxu0 %v841
        %858 = vmatprep.subr.bf16.mxu0 0
        %859 = vmatpush1.bf16.msra.mxu0 %v840
        %860 = vmatprep.subr.bf16.mxu0 0
        %861 = vmatpush1.bf16.msra.mxu0 %v839
        %862 = vmatprep.subr.bf16.mxu0 0
        %863 = vmatpush1.bf16.msra.mxu0 %v838
        %864 = vmatprep.subr.bf16.mxu0 0
        %865 = vmatpush1.bf16.msra.mxu0 %v837
        %866 = vmatprep.subr.bf16.mxu0 0
        %867 = vmatpush1.bf16.msra.mxu0 %v836
        %868 = vmatprep.subr.bf16.mxu0 0
        %869 = vmatpush2.bf16.msra.mxu0 0
        %870 = vmatprep.subr.bf16.mxu0 0
        %871 = vmatpush2.bf16.msra.mxu0 0
        %872 = vmatprep.subr.bf16.mxu0 0
        %873 = vmatpush2.bf16.msra.mxu0 0
        %874 = vmatprep.subr.bf16.mxu0 0
        %875 = vmatpush2.bf16.msra.mxu0 0
        %876 = vmatprep.subr.bf16.mxu0 0
        %877 = vmatpush2.bf16.msra.mxu0 0
        %878 = vmatprep.subr.bf16.mxu0 0
        %879 = vmatpush2.bf16.msra.mxu0 0
        %880 = vmatprep.subr.bf16.mxu0 0
        %881 = vmatpush2.bf16.msra.mxu0 0
        %882 = vmatprep.subr.bf16.mxu0 0
        %883 = vmatpush2.bf16.msra.mxu0 0
        %884 = vmatprep.mubr.bf16.mxu0 0
        %885 = vmatmul.mubr.bf16.gmra.mxu0 %v779
        %v886 = vpop.f32.mrf.mxu0
        %v887 = vadd.f32 %v802, %v886
        %v888 = vpop.f32.mrf.mxu0
        %v889 = vpop.f32.mrf.mxu0
        %v890 = vadd.f32 %v802, %v889
        %v891 = vpop.f32.mrf.mxu0
        %892 = vmatprep.mubr.bf16.mxu0 0
        %893 = vmatmul.mubr.bf16.gmra.mxu0 %v780
        %v894 = vpop.f32.mrf.mxu0
        %v895 = vadd.f32 %v802, %v894
        %v896 = vpop.f32.mrf.mxu0
        %v897 = vpop.f32.mrf.mxu0
        %v898 = vadd.f32 %v802, %v897
        %v899 = vpop.f32.mrf.mxu0
        %900 = vdwg.mxu0
        %v901 = vmax.f32 %v887, 0.0
        %v902 = vmax.f32 %v890, 0.0
        %v903 = vmax.f32 %v895, 0.0
        %v904 = vmax.f32 %v898, 0.0
        %v905 = vpack.c.bf16 %v902, %v901
        %v906 = vpack.c.bf16 %v904, %v903
        %v907 = vld [vmem:[%s5] sm:$0xf]
        %v908 = vld [vmem:[%s5 + $0x4] sm:$0xf]
        %v909 = vld [vmem:[%s5 + $0x8] sm:$0xf]
        %v910 = vld [vmem:[%s5 + $0xc] sm:$0xf]
        %v911 = vld [vmem:[%s5 + $0x10] sm:$0xf]
        %v912 = vld [vmem:[%s5 + $0x14] sm:$0xf]
        %v913 = vld [vmem:[%s5 + $0x18] sm:$0xf]
        %v914 = vld [vmem:[%s5 + $0x1c] sm:$0xf]
        %v915 = vld [vmem:[%s5 + $0x20] sm:$0xf]
        %v916 = vld [vmem:[%s5 + $0x24] sm:$0xf]
        %v917 = vld [vmem:[%s5 + $0x28] sm:$0xf]
        %v918 = vld [vmem:[%s5 + $0x2c] sm:$0xf]
        %v919 = vld [vmem:[%s5 + $0x30] sm:$0xf]
        %v920 = vld [vmem:[%s5 + $0x34] sm:$0xf]
        %v921 = vld [vmem:[%s5 + $0x38] sm:$0xf]
        %v922 = vld [vmem:[%s5 + $0x3c] sm:$0xf]
        %v939 = vunpack.c.l.b16 %v907
        %v940 = vunpack.c.l.b16 %v908
        %v941 = vunpack.c.l.b16 %v909
        %v942 = vunpack.c.l.b16 %v910
        %v943 = vunpack.c.l.b16 %v911
        %v944 = vunpack.c.l.b16 %v912
        %v945 = vunpack.c.l.b16 %v913
        %v946 = vunpack.c.l.b16 %v914
        %v947 = vunpack.c.l.b16 %v915
        %v948 = vunpack.c.l.b16 %v916
        %v949 = vunpack.c.l.b16 %v917
        %v950 = vunpack.c.l.b16 %v918
        %v951 = vunpack.c.l.b16 %v919
        %v952 = vunpack.c.l.b16 %v920
        %v953 = vunpack.c.l.b16 %v921
        %v954 = vunpack.c.l.b16 %v922
        %v955 = vpack.c.b16 %v940, %v939
        %v956 = vpack.c.b16 %v942, %v941
        %v957 = vpack.c.b16 %v944, %v943
        %v958 = vpack.c.b16 %v946, %v945
        %v959 = vpack.c.b16 %v948, %v947
        %v960 = vpack.c.b16 %v950, %v949
        %v961 = vpack.c.b16 %v952, %v951
        %v962 = vpack.c.b16 %v954, %v953
        %971 = vmatprep.subr.bf16.mxu0 0
        %972 = vmatpush1.bf16.msra.mxu0 %v962
        %973 = vmatprep.subr.bf16.mxu0 0
        %974 = vmatpush1.bf16.msra.mxu0 %v961
        %975 = vmatprep.subr.bf16.mxu0 0
        %976 = vmatpush1.bf16.msra.mxu0 %v960
        %977 = vmatprep.subr.bf16.mxu0 0
        %978 = vmatpush1.bf16.msra.mxu0 %v959
        %979 = vmatprep.subr.bf16.mxu0 0
        %980 = vmatpush1.bf16.msra.mxu0 %v958
        %981 = vmatprep.subr.bf16.mxu0 0
        %982 = vmatpush1.bf16.msra.mxu0 %v957
        %983 = vmatprep.subr.bf16.mxu0 0
        %984 = vmatpush1.bf16.msra.mxu0 %v956
        %985 = vmatprep.subr.bf16.mxu0 0
        %986 = vmatpush1.bf16.msra.mxu0 %v955
        %987 = vmatprep.subr.bf16.mxu0 0
        %988 = vmatpush2.bf16.msra.mxu0 0
        %989 = vmatprep.subr.bf16.mxu0 0
        %990 = vmatpush2.bf16.msra.mxu0 0
        %991 = vmatprep.subr.bf16.mxu0 0
        %992 = vmatpush2.bf16.msra.mxu0 0
        %993 = vmatprep.subr.bf16.mxu0 0
        %994 = vmatpush2.bf16.msra.mxu0 0
        %995 = vmatprep.subr.bf16.mxu0 0
        %996 = vmatpush2.bf16.msra.mxu0 0
        %997 = vmatprep.subr.bf16.mxu0 0
        %998 = vmatpush2.bf16.msra.mxu0 0
        %999 = vmatprep.subr.bf16.mxu0 0
        %1000 = vmatpush2.bf16.msra.mxu0 0
        %1001 = vmatprep.subr.bf16.mxu0 0
        %1002 = vmatpush2.bf16.msra.mxu0 0
        %1003 = vmatprep.mubr.bf16.mxu0 0
        %1004 = vmatmul.mubr.bf16.gmra.mxu0 %v905
        %v1005 = vpop.f32.mrf.mxu0
        %v1006 = vadd.f32 0.0, %v1005
        %v1007 = vpop.f32.mrf.mxu0
        %v1008 = vpop.f32.mrf.mxu0
        %v1009 = vadd.f32 0.0, %v1008
        %v1010 = vpop.f32.mrf.mxu0
        %1011 = vmatprep.mubr.bf16.mxu0 0
        %1012 = vmatmul.mubr.bf16.gmra.mxu0 %v906
        %v1013 = vpop.f32.mrf.mxu0
        %v1014 = vadd.f32 0.0, %v1013
        %v1015 = vpop.f32.mrf.mxu0
        %v1016 = vpop.f32.mrf.mxu0
        %v1017 = vadd.f32 0.0, %v1016
        %v1018 = vpop.f32.mrf.mxu0
        %1019 = vdwg.mxu0
        %v1020 = vld [vmem:[%s575] sm:$0xff]
        %v1021 = vld [vmem:[%s575 + $0x10] sm:$0xff]
        %v1022 = vld [vmem:[%s575 + $0x20] sm:$0xff]
        %v1023 = vld [vmem:[%s575 + $0x30] sm:$0xff]
        %1024 = vst [vmem:[%s647] sm:$0xff] %v1006
        %1025 = vst [vmem:[%s647 + $0x10] sm:$0xff] %v1009
        %1026 = vst [vmem:[%s647 + $0x20] sm:$0xff] %v1014
        %1027 = vst [vmem:[%s647 + $0x30] sm:$0xff] %v1017
        %v1028 = vld [vmem:[%s6] sm:$0xf]
        %v1029 = vlaneseq
        %v1030 = vshrl.u32 %v1029, 7
        %v1031 = vsub.s32 0, %v1030
        %v1032 = vrot.slane %v1028, %v1031
        %v1033 = vmul.f32 %v1020, %v1032
        %v1034 = vmul.f32 %v1006, %v1032
        %v1035 = vmul.f32 %v1021, %v1032
        %v1036 = vmul.f32 %v1009, %v1032
        %v1037 = vmul.f32 %v1022, %v1032
        %v1038 = vmul.f32 %v1014, %v1032
        %v1039 = vmul.f32 %v1023, %v1032
        %v1040 = vmul.f32 %v1017, %v1032
        %v1041 = vadd.f32 %v1033, 0.0
        %v1042 = vadd.f32 %v1034, 0.0
        %v1043 = vadd.f32 %v1035, 0.0
        %v1044 = vadd.f32 %v1036, 0.0
        %v1045 = vadd.f32 %v1037, 0.0
        %v1046 = vadd.f32 %v1038, 0.0
        %v1047 = vadd.f32 %v1039, 0.0
        %v1048 = vadd.f32 %v1040, 0.0
        %v1049 = vlaneseq
        %v1050 = vshrl.u32 %v1049, 7
        %v1051 = vsub.s32 1, %v1050
        %v1052 = vrot.slane %v1028, %v1051
        %v1053 = vmul.f32 %v1020, %v1052
        %v1054 = vmul.f32 %v1006, %v1052
        %v1055 = vmul.f32 %v1021, %v1052
        %v1056 = vmul.f32 %v1009, %v1052
        %v1057 = vmul.f32 %v1022, %v1052
        %v1058 = vmul.f32 %v1014, %v1052
        %v1059 = vmul.f32 %v1023, %v1052
        %v1060 = vmul.f32 %v1017, %v1052
        %vm1069 = vcmask 1046528
        %v1070 = vrot.slane %v1053, 1
        %v1071 = vrot.slane %v1054, 1
        %v1072 = vsel %vm1069, %v1070, %v1071
        %v1073 = vrot.slane %v1055, 1
        %v1074 = vrot.slane %v1056, 1
        %v1075 = vsel %vm1069, %v1073, %v1074
        %v1076 = vrot.slane %v1057, 1
        %v1077 = vrot.slane %v1058, 1
        %v1078 = vsel %vm1069, %v1076, %v1077
        %v1079 = vrot.slane %v1059, 1
        %v1080 = vrot.slane %v1060, 1
        %v1081 = vsel %vm1069, %v1079, %v1080
        %v1090 = vadd.f32 %v1041, %v1072
        %v1091 = vadd.f32 %v1042, %v1071
        %v1092 = vadd.f32 %v1043, %v1075
        %v1093 = vadd.f32 %v1044, %v1074
        %v1094 = vadd.f32 %v1045, %v1078
        %v1095 = vadd.f32 %v1046, %v1077
        %v1096 = vadd.f32 %v1047, %v1081
        %v1097 = vadd.f32 %v1048, %v1080
        %v1098 = vlaneseq
        %v1099 = vshrl.u32 %v1098, 7
        %v1100 = vsub.s32 2, %v1099
        %v1101 = vrot.slane %v1028, %v1100
        %v1102 = vmul.f32 %v1020, %v1101
        %v1103 = vmul.f32 %v1006, %v1101
        %v1104 = vmul.f32 %v1021, %v1101
        %v1105 = vmul.f32 %v1009, %v1101
        %v1106 = vmul.f32 %v1022, %v1101
        %v1107 = vmul.f32 %v1014, %v1101
        %v1108 = vmul.f32 %v1023, %v1101
        %v1109 = vmul.f32 %v1017, %v1101
        %vm1118 = vcmask 1045504
        %v1119 = vrot.slane %v1102, 2
        %v1120 = vrot.slane %v1103, 2
        %v1121 = vsel %vm1118, %v1119, %v1120
        %v1122 = vrot.slane %v1104, 2
        %v1123 = vrot.slane %v1105, 2
        %v1124 = vsel %vm1118, %v1122, %v1123
        %v1125 = vrot.slane %v1106, 2
        %v1126 = vrot.slane %v1107, 2
        %v1127 = vsel %vm1118, %v1125, %v1126
        %v1128 = vrot.slane %v1108, 2
        %v1129 = vrot.slane %v1109, 2
        %v1130 = vsel %vm1118, %v1128, %v1129
        %v1139 = vadd.f32 %v1090, %v1121
        %v1140 = vadd.f32 %v1091, %v1120
        %v1141 = vadd.f32 %v1092, %v1124
        %v1142 = vadd.f32 %v1093, %v1123
        %v1143 = vadd.f32 %v1094, %v1127
        %v1144 = vadd.f32 %v1095, %v1126
        %v1145 = vadd.f32 %v1096, %v1130
        %v1146 = vadd.f32 %v1097, %v1129
        %v1147 = vlaneseq
        %v1148 = vshrl.u32 %v1147, 7
        %v1149 = vsub.s32 3, %v1148
        %v1150 = vrot.slane %v1028, %v1149
        %v1151 = vmul.f32 %v1006, %v1150
        %v1152 = vmul.f32 %v1009, %v1150
        %v1153 = vmul.f32 %v1014, %v1150
        %v1154 = vmul.f32 %v1017, %v1150
        %v1159 = vrot.slane %v1151, 3
        %v1160 = vrot.slane %v1152, 3
        %v1161 = vrot.slane %v1153, 3
        %v1162 = vrot.slane %v1154, 3
        %v1167 = vadd.f32 %v1139, %v1159
        %v1168 = vadd.f32 %v1140, %v1159
        %v1169 = vadd.f32 %v1141, %v1160
        %v1170 = vadd.f32 %v1142, %v1160
        %v1171 = vadd.f32 %v1143, %v1161
        %v1172 = vadd.f32 %v1144, %v1161
        %v1173 = vadd.f32 %v1145, %v1162
        %v1174 = vadd.f32 %v1146, %v1162
        %vm1183 = vcmask 1042432
        %v1184 = vrot.slane %v1167, 5
        %v1185 = vrot.slane %v1168, 5
        %v1186 = vsel %vm1183, %v1184, %v1185
        %v1187 = vrot.slane %v1169, 5
        %v1188 = vrot.slane %v1170, 5
        %v1189 = vsel %vm1183, %v1187, %v1188
        %v1190 = vrot.slane %v1171, 5
        %v1191 = vrot.slane %v1172, 5
        %v1192 = vsel %vm1183, %v1190, %v1191
        %v1193 = vrot.slane %v1173, 5
        %v1194 = vrot.slane %v1174, 5
        %v1195 = vsel %vm1183, %v1193, %v1194
        %v1200 = vadd.f32 %v1006, %v1186
        %v1201 = vadd.f32 %v1009, %v1189
        %v1202 = vadd.f32 %v1014, %v1192
        %v1203 = vadd.f32 %v1017, %v1195
        %v1204 = vpack.c.bf16 %v1201, %v1200
        %v1205 = vpack.c.bf16 %v1203, %v1202
        %v1206 = vld [vmem:[%s7] sm:$0xf]
        %v1207 = vld [vmem:[%s7 + $0x4] sm:$0xf]
        %v1208 = vld [vmem:[%s7 + $0x8] sm:$0xf]
        %v1209 = vld [vmem:[%s7 + $0xc] sm:$0xf]
        %v1210 = vld [vmem:[%s7 + $0x10] sm:$0xf]
        %v1211 = vld [vmem:[%s7 + $0x14] sm:$0xf]
        %v1212 = vld [vmem:[%s7 + $0x18] sm:$0xf]
        %v1213 = vld [vmem:[%s7 + $0x1c] sm:$0xf]
        %v1214 = vld [vmem:[%s7 + $0x20] sm:$0xf]
        %v1215 = vld [vmem:[%s7 + $0x24] sm:$0xf]
        %v1216 = vld [vmem:[%s7 + $0x28] sm:$0xf]
        %v1217 = vld [vmem:[%s7 + $0x2c] sm:$0xf]
        %v1218 = vld [vmem:[%s7 + $0x30] sm:$0xf]
        %v1219 = vld [vmem:[%s7 + $0x34] sm:$0xf]
        %v1220 = vld [vmem:[%s7 + $0x38] sm:$0xf]
        %v1221 = vld [vmem:[%s7 + $0x3c] sm:$0xf]
        %v1222 = vld [vmem:[%s8] sm:$0x1]
        %v1224 = vlaneseq
        %v1225 = vshrl.u32 %v1224, 7
        %v1226 = vsub.s32 0, %v1225
        %v1227 = vrot.slane %v1222, %v1226
        %v1245 = vunpack.c.l.b16 %v1206
        %v1246 = vunpack.c.l.b16 %v1207
        %v1247 = vunpack.c.l.b16 %v1208
        %v1248 = vunpack.c.l.b16 %v1209
        %v1249 = vunpack.c.l.b16 %v1210
        %v1250 = vunpack.c.l.b16 %v1211
        %v1251 = vunpack.c.l.b16 %v1212
        %v1252 = vunpack.c.l.b16 %v1213
        %v1253 = vunpack.c.l.b16 %v1214
        %v1254 = vunpack.c.l.b16 %v1215
        %v1255 = vunpack.c.l.b16 %v1216
        %v1256 = vunpack.c.l.b16 %v1217
        %v1257 = vunpack.c.l.b16 %v1218
        %v1258 = vunpack.c.l.b16 %v1219
        %v1259 = vunpack.c.l.b16 %v1220
        %v1260 = vunpack.c.l.b16 %v1221
        %v1261 = vpack.c.b16 %v1246, %v1245
        %v1262 = vpack.c.b16 %v1248, %v1247
        %v1263 = vpack.c.b16 %v1250, %v1249
        %v1264 = vpack.c.b16 %v1252, %v1251
        %v1265 = vpack.c.b16 %v1254, %v1253
        %v1266 = vpack.c.b16 %v1256, %v1255
        %v1267 = vpack.c.b16 %v1258, %v1257
        %v1268 = vpack.c.b16 %v1260, %v1259
        %1277 = vmatprep.subr.bf16.mxu0 0
        %1278 = vmatpush1.bf16.msra.mxu0 %v1268
        %1279 = vmatprep.subr.bf16.mxu0 0
        %1280 = vmatpush1.bf16.msra.mxu0 %v1267
        %1281 = vmatprep.subr.bf16.mxu0 0
        %1282 = vmatpush1.bf16.msra.mxu0 %v1266
        %1283 = vmatprep.subr.bf16.mxu0 0
        %1284 = vmatpush1.bf16.msra.mxu0 %v1265
        %1285 = vmatprep.subr.bf16.mxu0 0
        %1286 = vmatpush1.bf16.msra.mxu0 %v1264
        %1287 = vmatprep.subr.bf16.mxu0 0
        %1288 = vmatpush1.bf16.msra.mxu0 %v1263
        %1289 = vmatprep.subr.bf16.mxu0 0
        %1290 = vmatpush1.bf16.msra.mxu0 %v1262
        %1291 = vmatprep.subr.bf16.mxu0 0
        %1292 = vmatpush1.bf16.msra.mxu0 %v1261
        %1293 = vmatprep.subr.bf16.mxu0 0
        %1294 = vmatpush2.bf16.msra.mxu0 0
        %1295 = vmatprep.subr.bf16.mxu0 0
        %1296 = vmatpush2.bf16.msra.mxu0 0
        %1297 = vmatprep.subr.bf16.mxu0 0
        %1298 = vmatpush2.bf16.msra.mxu0 0
        %1299 = vmatprep.subr.bf16.mxu0 0
        %1300 = vmatpush2.bf16.msra.mxu0 0
        %1301 = vmatprep.subr.bf16.mxu0 0
        %1302 = vmatpush2.bf16.msra.mxu0 0
        %1303 = vmatprep.subr.bf16.mxu0 0
        %1304 = vmatpush2.bf16.msra.mxu0 0
        %1305 = vmatprep.subr.bf16.mxu0 0
        %1306 = vmatpush2.bf16.msra.mxu0 0
        %1307 = vmatprep.subr.bf16.mxu0 0
        %1308 = vmatpush2.bf16.msra.mxu0 0
        %1309 = vmatprep.mubr.bf16.mxu0 0
        %1310 = vmatmul.mubr.bf16.gmra.mxu0 %v1204
        %v1311 = vpop.f32.mrf.mxu0
        %v1312 = vadd.f32 %v1227, %v1311
        %v1313 = vpop.f32.mrf.mxu0
        %v1314 = vpop.f32.mrf.mxu0
        %v1315 = vadd.f32 %v1227, %v1314
        %v1316 = vpop.f32.mrf.mxu0
        %1317 = vmatprep.mubr.bf16.mxu0 0
        %1318 = vmatmul.mubr.bf16.gmra.mxu0 %v1205
        %v1319 = vpop.f32.mrf.mxu0
        %v1320 = vadd.f32 %v1227, %v1319
        %v1321 = vpop.f32.mrf.mxu0
        %v1322 = vpop.f32.mrf.mxu0
        %v1323 = vadd.f32 %v1227, %v1322
        %v1324 = vpop.f32.mrf.mxu0
        %1325 = vdwg.mxu0
        %v1326 = vmax.f32 %v1312, 0.0
        %v1327 = vmax.f32 %v1315, 0.0
        %v1328 = vmax.f32 %v1320, 0.0
        %v1329 = vmax.f32 %v1323, 0.0
        %v1330 = vpack.c.bf16 %v1327, %v1326
        %v1331 = vpack.c.bf16 %v1329, %v1328
        %s1332 = scalar_lea.vmem %s5, 64
        %v1333 = vld [vmem:[%s1332] sm:$0xf]
        %v1334 = vld [vmem:[%s1332 + $0x4] sm:$0xf]
        %v1335 = vld [vmem:[%s1332 + $0x8] sm:$0xf]
        %v1336 = vld [vmem:[%s1332 + $0xc] sm:$0xf]
        %v1337 = vld [vmem:[%s1332 + $0x10] sm:$0xf]
        %v1338 = vld [vmem:[%s1332 + $0x14] sm:$0xf]
        %v1339 = vld [vmem:[%s1332 + $0x18] sm:$0xf]
        %v1340 = vld [vmem:[%s1332 + $0x1c] sm:$0xf]
        %v1341 = vld [vmem:[%s1332 + $0x20] sm:$0xf]
        %v1342 = vld [vmem:[%s1332 + $0x24] sm:$0xf]
        %v1343 = vld [vmem:[%s1332 + $0x28] sm:$0xf]
        %v1344 = vld [vmem:[%s1332 + $0x2c] sm:$0xf]
        %v1345 = vld [vmem:[%s1332 + $0x30] sm:$0xf]
        %v1346 = vld [vmem:[%s1332 + $0x34] sm:$0xf]
        %v1347 = vld [vmem:[%s1332 + $0x38] sm:$0xf]
        %v1348 = vld [vmem:[%s1332 + $0x3c] sm:$0xf]
        %v1365 = vunpack.c.l.b16 %v1333
        %v1366 = vunpack.c.l.b16 %v1334
        %v1367 = vunpack.c.l.b16 %v1335
        %v1368 = vunpack.c.l.b16 %v1336
        %v1369 = vunpack.c.l.b16 %v1337
        %v1370 = vunpack.c.l.b16 %v1338
        %v1371 = vunpack.c.l.b16 %v1339
        %v1372 = vunpack.c.l.b16 %v1340
        %v1373 = vunpack.c.l.b16 %v1341
        %v1374 = vunpack.c.l.b16 %v1342
        %v1375 = vunpack.c.l.b16 %v1343
        %v1376 = vunpack.c.l.b16 %v1344
        %v1377 = vunpack.c.l.b16 %v1345
        %v1378 = vunpack.c.l.b16 %v1346
        %v1379 = vunpack.c.l.b16 %v1347
        %v1380 = vunpack.c.l.b16 %v1348
        %v1381 = vpack.c.b16 %v1366, %v1365
        %v1382 = vpack.c.b16 %v1368, %v1367
        %v1383 = vpack.c.b16 %v1370, %v1369
        %v1384 = vpack.c.b16 %v1372, %v1371
        %v1385 = vpack.c.b16 %v1374, %v1373
        %v1386 = vpack.c.b16 %v1376, %v1375
        %v1387 = vpack.c.b16 %v1378, %v1377
        %v1388 = vpack.c.b16 %v1380, %v1379
        %1397 = vmatprep.subr.bf16.mxu0 0
        %1398 = vmatpush1.bf16.msra.mxu0 %v1388
        %1399 = vmatprep.subr.bf16.mxu0 0
        %1400 = vmatpush1.bf16.msra.mxu0 %v1387
        %1401 = vmatprep.subr.bf16.mxu0 0
        %1402 = vmatpush1.bf16.msra.mxu0 %v1386
        %1403 = vmatprep.subr.bf16.mxu0 0
        %1404 = vmatpush1.bf16.msra.mxu0 %v1385
        %1405 = vmatprep.subr.bf16.mxu0 0
        %1406 = vmatpush1.bf16.msra.mxu0 %v1384
        %1407 = vmatprep.subr.bf16.mxu0 0
        %1408 = vmatpush1.bf16.msra.mxu0 %v1383
        %1409 = vmatprep.subr.bf16.mxu0 0
        %1410 = vmatpush1.bf16.msra.mxu0 %v1382
        %1411 = vmatprep.subr.bf16.mxu0 0
        %1412 = vmatpush1.bf16.msra.mxu0 %v1381
        %1413 = vmatprep.subr.bf16.mxu0 0
        %1414 = vmatpush2.bf16.msra.mxu0 0
        %1415 = vmatprep.subr.bf16.mxu0 0
        %1416 = vmatpush2.bf16.msra.mxu0 0
        %1417 = vmatprep.subr.bf16.mxu0 0
        %1418 = vmatpush2.bf16.msra.mxu0 0
        %1419 = vmatprep.subr.bf16.mxu0 0
        %1420 = vmatpush2.bf16.msra.mxu0 0
        %1421 = vmatprep.subr.bf16.mxu0 0
        %1422 = vmatpush2.bf16.msra.mxu0 0
        %1423 = vmatprep.subr.bf16.mxu0 0
        %1424 = vmatpush2.bf16.msra.mxu0 0
        %1425 = vmatprep.subr.bf16.mxu0 0
        %1426 = vmatpush2.bf16.msra.mxu0 0
        %1427 = vmatprep.subr.bf16.mxu0 0
        %1428 = vmatpush2.bf16.msra.mxu0 0
        %1429 = vmatprep.mubr.bf16.mxu0 0
        %1430 = vmatmul.mubr.bf16.gmra.mxu0 %v1330
        %v1431 = vpop.f32.mrf.mxu0
        %v1432 = vadd.f32 0.0, %v1431
        %v1433 = vpop.f32.mrf.mxu0
        %v1434 = vpop.f32.mrf.mxu0
        %v1435 = vadd.f32 0.0, %v1434
        %v1436 = vpop.f32.mrf.mxu0
        %1437 = vmatprep.mubr.bf16.mxu0 0
        %1438 = vmatmul.mubr.bf16.gmra.mxu0 %v1331
        %v1439 = vpop.f32.mrf.mxu0
        %v1440 = vadd.f32 0.0, %v1439
        %v1441 = vpop.f32.mrf.mxu0
        %v1442 = vpop.f32.mrf.mxu0
        %v1443 = vadd.f32 0.0, %v1442
        %v1444 = vpop.f32.mrf.mxu0
        %1445 = vdwg.mxu0
        %v1446 = vld [vmem:[%s575 + $0x8] sm:$0xff]
        %v1447 = vld [vmem:[%s575 + $0x18] sm:$0xff]
        %v1448 = vld [vmem:[%s575 + $0x28] sm:$0xff]
        %v1449 = vld [vmem:[%s575 + $0x38] sm:$0xff]
        %1450 = vst [vmem:[%s647 + $0x8] sm:$0xff] %v1432
        %1451 = vst [vmem:[%s647 + $0x18] sm:$0xff] %v1435
        %1452 = vst [vmem:[%s647 + $0x28] sm:$0xff] %v1440
        %1453 = vst [vmem:[%s647 + $0x38] sm:$0xff] %v1443
        %s1454 = scalar_lea.vmem %s6, 4
        %v1455 = vld [vmem:[%s1454] sm:$0xf]
        %v1456 = vlaneseq
        %v1457 = vshrl.u32 %v1456, 7
        %v1458 = vsub.s32 0, %v1457
        %v1459 = vrot.slane %v1455, %v1458
        %v1460 = vmul.f32 %v1446, %v1459
        %v1461 = vmul.f32 %v1432, %v1459
        %v1462 = vmul.f32 %v1447, %v1459
        %v1463 = vmul.f32 %v1435, %v1459
        %v1464 = vmul.f32 %v1448, %v1459
        %v1465 = vmul.f32 %v1440, %v1459
        %v1466 = vmul.f32 %v1449, %v1459
        %v1467 = vmul.f32 %v1443, %v1459
        %v1468 = vadd.f32 %v1460, 0.0
        %v1469 = vadd.f32 %v1461, 0.0
        %v1470 = vadd.f32 %v1462, 0.0
        %v1471 = vadd.f32 %v1463, 0.0
        %v1472 = vadd.f32 %v1464, 0.0
        %v1473 = vadd.f32 %v1465, 0.0
        %v1474 = vadd.f32 %v1466, 0.0
        %v1475 = vadd.f32 %v1467, 0.0
        %v1476 = vlaneseq
        %v1477 = vshrl.u32 %v1476, 7
        %v1478 = vsub.s32 1, %v1477
        %v1479 = vrot.slane %v1455, %v1478
        %v1480 = vmul.f32 %v1446, %v1479
        %v1481 = vmul.f32 %v1432, %v1479
        %v1482 = vmul.f32 %v1447, %v1479
        %v1483 = vmul.f32 %v1435, %v1479
        %v1484 = vmul.f32 %v1448, %v1479
        %v1485 = vmul.f32 %v1440, %v1479
        %v1486 = vmul.f32 %v1449, %v1479
        %v1487 = vmul.f32 %v1443, %v1479
        %v1496 = vrot.slane %v1480, 1
        %v1497 = vrot.slane %v1481, 1
        %v1498 = vsel %vm1069, %v1496, %v1497
        %v1499 = vrot.slane %v1482, 1
        %v1500 = vrot.slane %v1483, 1
        %v1501 = vsel %vm1069, %v1499, %v1500
        %v1502 = vrot.slane %v1484, 1
        %v1503 = vrot.slane %v1485, 1
        %v1504 = vsel %vm1069, %v1502, %v1503
        %v1505 = vrot.slane %v1486, 1
        %v1506 = vrot.slane %v1487, 1
        %v1507 = vsel %vm1069, %v1505, %v1506
        %v1516 = vadd.f32 %v1468, %v1498
        %v1517 = vadd.f32 %v1469, %v1497
        %v1518 = vadd.f32 %v1470, %v1501
        %v1519 = vadd.f32 %v1471, %v1500
        %v1520 = vadd.f32 %v1472, %v1504
        %v1521 = vadd.f32 %v1473, %v1503
        %v1522 = vadd.f32 %v1474, %v1507
        %v1523 = vadd.f32 %v1475, %v1506
        %v1524 = vlaneseq
        %v1525 = vshrl.u32 %v1524, 7
        %v1526 = vsub.s32 2, %v1525
        %v1527 = vrot.slane %v1455, %v1526
        %v1528 = vmul.f32 %v1446, %v1527
        %v1529 = vmul.f32 %v1432, %v1527
        %v1530 = vmul.f32 %v1447, %v1527
        %v1531 = vmul.f32 %v1435, %v1527
        %v1532 = vmul.f32 %v1448, %v1527
        %v1533 = vmul.f32 %v1440, %v1527
        %v1534 = vmul.f32 %v1449, %v1527
        %v1535 = vmul.f32 %v1443, %v1527
        %v1544 = vrot.slane %v1528, 2
        %v1545 = vrot.slane %v1529, 2
        %v1546 = vsel %vm1118, %v1544, %v1545
        %v1547 = vrot.slane %v1530, 2
        %v1548 = vrot.slane %v1531, 2
        %v1549 = vsel %vm1118, %v1547, %v1548
        %v1550 = vrot.slane %v1532, 2
        %v1551 = vrot.slane %v1533, 2
        %v1552 = vsel %vm1118, %v1550, %v1551
        %v1553 = vrot.slane %v1534, 2
        %v1554 = vrot.slane %v1535, 2
        %v1555 = vsel %vm1118, %v1553, %v1554
        %v1564 = vadd.f32 %v1516, %v1546
        %v1565 = vadd.f32 %v1517, %v1545
        %v1566 = vadd.f32 %v1518, %v1549
        %v1567 = vadd.f32 %v1519, %v1548
        %v1568 = vadd.f32 %v1520, %v1552
        %v1569 = vadd.f32 %v1521, %v1551
        %v1570 = vadd.f32 %v1522, %v1555
        %v1571 = vadd.f32 %v1523, %v1554
        %v1572 = vlaneseq
        %v1573 = vshrl.u32 %v1572, 7
        %v1574 = vsub.s32 3, %v1573
        %v1575 = vrot.slane %v1455, %v1574
        %v1576 = vmul.f32 %v1432, %v1575
        %v1577 = vmul.f32 %v1435, %v1575
        %v1578 = vmul.f32 %v1440, %v1575
        %v1579 = vmul.f32 %v1443, %v1575
        %v1584 = vrot.slane %v1576, 3
        %v1585 = vrot.slane %v1577, 3
        %v1586 = vrot.slane %v1578, 3
        %v1587 = vrot.slane %v1579, 3
        %v1592 = vadd.f32 %v1564, %v1584
        %v1593 = vadd.f32 %v1565, %v1584
        %v1594 = vadd.f32 %v1566, %v1585
        %v1595 = vadd.f32 %v1567, %v1585
        %v1596 = vadd.f32 %v1568, %v1586
        %v1597 = vadd.f32 %v1569, %v1586
        %v1598 = vadd.f32 %v1570, %v1587
        %v1599 = vadd.f32 %v1571, %v1587
        %v1608 = vrot.slane %v1592, 5
        %v1609 = vrot.slane %v1593, 5
        %v1610 = vsel %vm1183, %v1608, %v1609
        %v1611 = vrot.slane %v1594, 5
        %v1612 = vrot.slane %v1595, 5
        %v1613 = vsel %vm1183, %v1611, %v1612
        %v1614 = vrot.slane %v1596, 5
        %v1615 = vrot.slane %v1597, 5
        %v1616 = vsel %vm1183, %v1614, %v1615
        %v1617 = vrot.slane %v1598, 5
        %v1618 = vrot.slane %v1599, 5
        %v1619 = vsel %vm1183, %v1617, %v1618
        %v1624 = vadd.f32 %v1432, %v1610
        %v1625 = vadd.f32 %v1435, %v1613
        %v1626 = vadd.f32 %v1440, %v1616
        %v1627 = vadd.f32 %v1443, %v1619
        %v1628 = vpack.c.bf16 %v1625, %v1624
        %v1629 = vpack.c.bf16 %v1627, %v1626
        %s1630 = scalar_lea.vmem %s7, 64
        %v1631 = vld [vmem:[%s1630] sm:$0xf]
        %v1632 = vld [vmem:[%s1630 + $0x4] sm:$0xf]
        %v1633 = vld [vmem:[%s1630 + $0x8] sm:$0xf]
        %v1634 = vld [vmem:[%s1630 + $0xc] sm:$0xf]
        %v1635 = vld [vmem:[%s1630 + $0x10] sm:$0xf]
        %v1636 = vld [vmem:[%s1630 + $0x14] sm:$0xf]
        %v1637 = vld [vmem:[%s1630 + $0x18] sm:$0xf]
        %v1638 = vld [vmem:[%s1630 + $0x1c] sm:$0xf]
        %v1639 = vld [vmem:[%s1630 + $0x20] sm:$0xf]
        %v1640 = vld [vmem:[%s1630 + $0x24] sm:$0xf]
        %v1641 = vld [vmem:[%s1630 + $0x28] sm:$0xf]
        %v1642 = vld [vmem:[%s1630 + $0x2c] sm:$0xf]
        %v1643 = vld [vmem:[%s1630 + $0x30] sm:$0xf]
        %v1644 = vld [vmem:[%s1630 + $0x34] sm:$0xf]
        %v1645 = vld [vmem:[%s1630 + $0x38] sm:$0xf]
        %v1646 = vld [vmem:[%s1630 + $0x3c] sm:$0xf]
        %s1647 = scalar_lea.vmem %s8, 1
        %v1648 = vld [vmem:[%s1647] sm:$0x1]
        %v1650 = vlaneseq
        %v1651 = vshrl.u32 %v1650, 7
        %v1652 = vsub.s32 0, %v1651
        %v1653 = vrot.slane %v1648, %v1652
        %v1671 = vunpack.c.l.b16 %v1631
        %v1672 = vunpack.c.l.b16 %v1632
        %v1673 = vunpack.c.l.b16 %v1633
        %v1674 = vunpack.c.l.b16 %v1634
        %v1675 = vunpack.c.l.b16 %v1635
        %v1676 = vunpack.c.l.b16 %v1636
        %v1677 = vunpack.c.l.b16 %v1637
        %v1678 = vunpack.c.l.b16 %v1638
        %v1679 = vunpack.c.l.b16 %v1639
        %v1680 = vunpack.c.l.b16 %v1640
        %v1681 = vunpack.c.l.b16 %v1641
        %v1682 = vunpack.c.l.b16 %v1642
        %v1683 = vunpack.c.l.b16 %v1643
        %v1684 = vunpack.c.l.b16 %v1644
        %v1685 = vunpack.c.l.b16 %v1645
        %v1686 = vunpack.c.l.b16 %v1646
        %v1687 = vpack.c.b16 %v1672, %v1671
        %v1688 = vpack.c.b16 %v1674, %v1673
        %v1689 = vpack.c.b16 %v1676, %v1675
        %v1690 = vpack.c.b16 %v1678, %v1677
        %v1691 = vpack.c.b16 %v1680, %v1679
        %v1692 = vpack.c.b16 %v1682, %v1681
        %v1693 = vpack.c.b16 %v1684, %v1683
        %v1694 = vpack.c.b16 %v1686, %v1685
        %1703 = vmatprep.subr.bf16.mxu0 0
        %1704 = vmatpush1.bf16.msra.mxu0 %v1694
        %1705 = vmatprep.subr.bf16.mxu0 0
        %1706 = vmatpush1.bf16.msra.mxu0 %v1693
        %1707 = vmatprep.subr.bf16.mxu0 0
        %1708 = vmatpush1.bf16.msra.mxu0 %v1692
        %1709 = vmatprep.subr.bf16.mxu0 0
        %1710 = vmatpush1.bf16.msra.mxu0 %v1691
        %1711 = vmatprep.subr.bf16.mxu0 0
        %1712 = vmatpush1.bf16.msra.mxu0 %v1690
        %1713 = vmatprep.subr.bf16.mxu0 0
        %1714 = vmatpush1.bf16.msra.mxu0 %v1689
        %1715 = vmatprep.subr.bf16.mxu0 0
        %1716 = vmatpush1.bf16.msra.mxu0 %v1688
        %1717 = vmatprep.subr.bf16.mxu0 0
        %1718 = vmatpush1.bf16.msra.mxu0 %v1687
        %1719 = vmatprep.subr.bf16.mxu0 0
        %1720 = vmatpush2.bf16.msra.mxu0 0
        %1721 = vmatprep.subr.bf16.mxu0 0
        %1722 = vmatpush2.bf16.msra.mxu0 0
        %1723 = vmatprep.subr.bf16.mxu0 0
        %1724 = vmatpush2.bf16.msra.mxu0 0
        %1725 = vmatprep.subr.bf16.mxu0 0
        %1726 = vmatpush2.bf16.msra.mxu0 0
        %1727 = vmatprep.subr.bf16.mxu0 0
        %1728 = vmatpush2.bf16.msra.mxu0 0
        %1729 = vmatprep.subr.bf16.mxu0 0
        %1730 = vmatpush2.bf16.msra.mxu0 0
        %1731 = vmatprep.subr.bf16.mxu0 0
        %1732 = vmatpush2.bf16.msra.mxu0 0
        %1733 = vmatprep.subr.bf16.mxu0 0
        %1734 = vmatpush2.bf16.msra.mxu0 0
        %1735 = vmatprep.mubr.bf16.mxu0 0
        %1736 = vmatmul.mubr.bf16.gmra.mxu0 %v1628
        %v1737 = vpop.f32.mrf.mxu0
        %v1738 = vadd.f32 %v1653, %v1737
        %v1739 = vpop.f32.mrf.mxu0
        %v1740 = vpop.f32.mrf.mxu0
        %v1741 = vadd.f32 %v1653, %v1740
        %v1742 = vpop.f32.mrf.mxu0
        %1743 = vmatprep.mubr.bf16.mxu0 0
        %1744 = vmatmul.mubr.bf16.gmra.mxu0 %v1629
        %v1745 = vpop.f32.mrf.mxu0
        %v1746 = vadd.f32 %v1653, %v1745
        %v1747 = vpop.f32.mrf.mxu0
        %v1748 = vpop.f32.mrf.mxu0
        %v1749 = vadd.f32 %v1653, %v1748
        %v1750 = vpop.f32.mrf.mxu0
        %1751 = vdwg.mxu0
        %v1752 = vmax.f32 %v1738, 0.0
        %v1753 = vmax.f32 %v1741, 0.0
        %v1754 = vmax.f32 %v1746, 0.0
        %v1755 = vmax.f32 %v1749, 0.0
        %v1756 = vpack.c.bf16 %v1753, %v1752
        %v1757 = vpack.c.bf16 %v1755, %v1754
        %v1758 = vld [vmem:[#allocation10] sm:$0xf]
        %v1759 = vld [vmem:[#allocation10 + $0x4] sm:$0xf]
        %v1760 = vld [vmem:[#allocation10 + $0x8] sm:$0xf]
        %v1761 = vld [vmem:[#allocation10 + $0xc] sm:$0xf]
        %v1762 = vld [vmem:[#allocation10 + $0x10] sm:$0xf]
        %v1763 = vld [vmem:[#allocation10 + $0x14] sm:$0xf]
        %v1764 = vld [vmem:[#allocation10 + $0x18] sm:$0xf]
        %v1765 = vld [vmem:[#allocation10 + $0x1c] sm:$0xf]
        %v1766 = vld [vmem:[#allocation10 + $0x20] sm:$0xf]
        %v1767 = vld [vmem:[#allocation10 + $0x24] sm:$0xf]
        %v1768 = vld [vmem:[#allocation10 + $0x28] sm:$0xf]
        %v1769 = vld [vmem:[#allocation10 + $0x2c] sm:$0xf]
        %v1770 = vld [vmem:[#allocation10 + $0x30] sm:$0xf]
        %v1771 = vld [vmem:[#allocation10 + $0x34] sm:$0xf]
        %v1772 = vld [vmem:[#allocation10 + $0x38] sm:$0xf]
        %v1773 = vld [vmem:[#allocation10 + $0x3c] sm:$0xf]
        %v1774 = vld [vmem:[#allocation11] sm:$0x1]
        %v1776 = vlaneseq
        %v1777 = vshrl.u32 %v1776, 7
        %v1778 = vsub.s32 0, %v1777
        %v1779 = vrot.slane %v1774, %v1778
        %v1797 = vunpack.c.l.b16 %v1758
        %v1798 = vunpack.c.l.b16 %v1759
        %v1799 = vunpack.c.l.b16 %v1760
        %v1800 = vunpack.c.l.b16 %v1761
        %v1801 = vunpack.c.l.b16 %v1762
        %v1802 = vunpack.c.l.b16 %v1763
        %v1803 = vunpack.c.l.b16 %v1764
        %v1804 = vunpack.c.l.b16 %v1765
        %v1805 = vunpack.c.l.b16 %v1766
        %v1806 = vunpack.c.l.b16 %v1767
        %v1807 = vunpack.c.l.b16 %v1768
        %v1808 = vunpack.c.l.b16 %v1769
        %v1809 = vunpack.c.l.b16 %v1770
        %v1810 = vunpack.c.l.b16 %v1771
        %v1811 = vunpack.c.l.b16 %v1772
        %v1812 = vunpack.c.l.b16 %v1773
        %v1813 = vpack.c.b16 %v1798, %v1797
        %v1814 = vpack.c.b16 %v1800, %v1799
        %v1815 = vpack.c.b16 %v1802, %v1801
        %v1816 = vpack.c.b16 %v1804, %v1803
        %v1817 = vpack.c.b16 %v1806, %v1805
        %v1818 = vpack.c.b16 %v1808, %v1807
        %v1819 = vpack.c.b16 %v1810, %v1809
        %v1820 = vpack.c.b16 %v1812, %v1811
        %1829 = vmatprep.subr.bf16.mxu0 0
        %1830 = vmatpush1.bf16.msra.mxu0 %v1820
        %1831 = vmatprep.subr.bf16.mxu0 0
        %1832 = vmatpush1.bf16.msra.mxu0 %v1819
        %1833 = vmatprep.subr.bf16.mxu0 0
        %1834 = vmatpush1.bf16.msra.mxu0 %v1818
        %1835 = vmatprep.subr.bf16.mxu0 0
        %1836 = vmatpush1.bf16.msra.mxu0 %v1817
        %1837 = vmatprep.subr.bf16.mxu0 0
        %1838 = vmatpush1.bf16.msra.mxu0 %v1816
        %1839 = vmatprep.subr.bf16.mxu0 0
        %1840 = vmatpush1.bf16.msra.mxu0 %v1815
        %1841 = vmatprep.subr.bf16.mxu0 0
        %1842 = vmatpush1.bf16.msra.mxu0 %v1814
        %1843 = vmatprep.subr.bf16.mxu0 0
        %1844 = vmatpush1.bf16.msra.mxu0 %v1813
        %1845 = vmatprep.subr.bf16.mxu0 0
        %1846 = vmatpush2.bf16.msra.mxu0 0
        %1847 = vmatprep.subr.bf16.mxu0 0
        %1848 = vmatpush2.bf16.msra.mxu0 0
        %1849 = vmatprep.subr.bf16.mxu0 0
        %1850 = vmatpush2.bf16.msra.mxu0 0
        %1851 = vmatprep.subr.bf16.mxu0 0
        %1852 = vmatpush2.bf16.msra.mxu0 0
        %1853 = vmatprep.subr.bf16.mxu0 0
        %1854 = vmatpush2.bf16.msra.mxu0 0
        %1855 = vmatprep.subr.bf16.mxu0 0
        %1856 = vmatpush2.bf16.msra.mxu0 0
        %1857 = vmatprep.subr.bf16.mxu0 0
        %1858 = vmatpush2.bf16.msra.mxu0 0
        %1859 = vmatprep.subr.bf16.mxu0 0
        %1860 = vmatpush2.bf16.msra.mxu0 0
        %1861 = vmatprep.mubr.bf16.mxu0 0
        %1862 = vmatmul.mubr.bf16.gmra.mxu0 %v1756
        %v1863 = vpop.f32.mrf.mxu0
        %v1864 = vadd.f32 %v1779, %v1863
        %v1865 = vpop.f32.mrf.mxu0
        %v1866 = vpop.f32.mrf.mxu0
        %v1867 = vadd.f32 %v1779, %v1866
        %v1868 = vpop.f32.mrf.mxu0
        %1869 = vmatprep.mubr.bf16.mxu0 0
        %1870 = vmatmul.mubr.bf16.gmra.mxu0 %v1757
        %v1871 = vpop.f32.mrf.mxu0
        %v1872 = vadd.f32 %v1779, %v1871
        %v1873 = vpop.f32.mrf.mxu0
        %v1874 = vpop.f32.mrf.mxu0
        %v1875 = vadd.f32 %v1779, %v1874
        %v1876 = vpop.f32.mrf.mxu0
        %1877 = vdwg.mxu0
        %v1878 = vpack.c.bf16 %v1867, %v1864
        %v1879 = vpack.c.bf16 %v1875, %v1872
        %v1880 = vld [vmem:[#allocation13] sm:$0xf]
        %v1881 = vld [vmem:[#allocation13 + $0x4] sm:$0xf]
        %v1882 = vld [vmem:[#allocation13 + $0x8] sm:$0xf]
        %v1883 = vld [vmem:[#allocation13 + $0xc] sm:$0xf]
        %v1884 = vld [vmem:[#allocation13 + $0x10] sm:$0xf]
        %v1885 = vld [vmem:[#allocation13 + $0x14] sm:$0xf]
        %v1886 = vld [vmem:[#allocation13 + $0x18] sm:$0xf]
        %v1887 = vld [vmem:[#allocation13 + $0x1c] sm:$0xf]
        %v1888 = vld [vmem:[#allocation13 + $0x20] sm:$0xf]
        %v1889 = vld [vmem:[#allocation13 + $0x24] sm:$0xf]
        %v1890 = vld [vmem:[#allocation13 + $0x28] sm:$0xf]
        %v1891 = vld [vmem:[#allocation13 + $0x2c] sm:$0xf]
        %v1892 = vld [vmem:[#allocation13 + $0x30] sm:$0xf]
        %v1893 = vld [vmem:[#allocation13 + $0x34] sm:$0xf]
        %v1894 = vld [vmem:[#allocation13 + $0x38] sm:$0xf]
        %v1895 = vld [vmem:[#allocation13 + $0x3c] sm:$0xf]
        %v1896 = vld [vmem:[#allocation14] sm:$0x1]
        %v1898 = vlaneseq
        %v1899 = vshrl.u32 %v1898, 7
        %v1900 = vsub.s32 0, %v1899
        %v1901 = vrot.slane %v1896, %v1900
        %v1919 = vunpack.c.l.b16 %v1880
        %v1920 = vunpack.c.l.b16 %v1881
        %v1921 = vunpack.c.l.b16 %v1882
        %v1922 = vunpack.c.l.b16 %v1883
        %v1923 = vunpack.c.l.b16 %v1884
        %v1924 = vunpack.c.l.b16 %v1885
        %v1925 = vunpack.c.l.b16 %v1886
        %v1926 = vunpack.c.l.b16 %v1887
        %v1927 = vunpack.c.l.b16 %v1888
        %v1928 = vunpack.c.l.b16 %v1889
        %v1929 = vunpack.c.l.b16 %v1890
        %v1930 = vunpack.c.l.b16 %v1891
        %v1931 = vunpack.c.l.b16 %v1892
        %v1932 = vunpack.c.l.b16 %v1893
        %v1933 = vunpack.c.l.b16 %v1894
        %v1934 = vunpack.c.l.b16 %v1895
        %v1935 = vpack.c.b16 %v1920, %v1919
        %v1936 = vpack.c.b16 %v1922, %v1921
        %v1937 = vpack.c.b16 %v1924, %v1923
        %v1938 = vpack.c.b16 %v1926, %v1925
        %v1939 = vpack.c.b16 %v1928, %v1927
        %v1940 = vpack.c.b16 %v1930, %v1929
        %v1941 = vpack.c.b16 %v1932, %v1931
        %v1942 = vpack.c.b16 %v1934, %v1933
        %1951 = vmatprep.subr.bf16.mxu0 0
        %1952 = vmatpush1.bf16.msra.mxu0 %v1942
        %1953 = vmatprep.subr.bf16.mxu0 0
        %1954 = vmatpush1.bf16.msra.mxu0 %v1941
        %1955 = vmatprep.subr.bf16.mxu0 0
        %1956 = vmatpush1.bf16.msra.mxu0 %v1940
        %1957 = vmatprep.subr.bf16.mxu0 0
        %1958 = vmatpush1.bf16.msra.mxu0 %v1939
        %1959 = vmatprep.subr.bf16.mxu0 0
        %1960 = vmatpush1.bf16.msra.mxu0 %v1938
        %1961 = vmatprep.subr.bf16.mxu0 0
        %1962 = vmatpush1.bf16.msra.mxu0 %v1937
        %1963 = vmatprep.subr.bf16.mxu0 0
        %1964 = vmatpush1.bf16.msra.mxu0 %v1936
        %1965 = vmatprep.subr.bf16.mxu0 0
        %1966 = vmatpush1.bf16.msra.mxu0 %v1935
        %1967 = vmatprep.subr.bf16.mxu0 0
        %1968 = vmatpush2.bf16.msra.mxu0 0
        %1969 = vmatprep.subr.bf16.mxu0 0
        %1970 = vmatpush2.bf16.msra.mxu0 0
        %1971 = vmatprep.subr.bf16.mxu0 0
        %1972 = vmatpush2.bf16.msra.mxu0 0
        %1973 = vmatprep.subr.bf16.mxu0 0
        %1974 = vmatpush2.bf16.msra.mxu0 0
        %1975 = vmatprep.subr.bf16.mxu0 0
        %1976 = vmatpush2.bf16.msra.mxu0 0
        %1977 = vmatprep.subr.bf16.mxu0 0
        %1978 = vmatpush2.bf16.msra.mxu0 0
        %1979 = vmatprep.subr.bf16.mxu0 0
        %1980 = vmatpush2.bf16.msra.mxu0 0
        %1981 = vmatprep.subr.bf16.mxu0 0
        %1982 = vmatpush2.bf16.msra.mxu0 0
        %1983 = vmatprep.mubr.bf16.mxu0 0
        %1984 = vmatmul.mubr.bf16.gmra.mxu0 %v1878
        %v1985 = vpop.f32.mrf.mxu0
        %v1986 = vadd.f32 %v1901, %v1985
        %v1987 = vpop.f32.mrf.mxu0
        %v1988 = vpop.f32.mrf.mxu0
        %v1989 = vadd.f32 %v1901, %v1988
        %v1990 = vpop.f32.mrf.mxu0
        %1991 = vmatprep.mubr.bf16.mxu0 0
        %1992 = vmatmul.mubr.bf16.gmra.mxu0 %v1879
        %v1993 = vpop.f32.mrf.mxu0
        %v1994 = vadd.f32 %v1901, %v1993
        %v1995 = vpop.f32.mrf.mxu0
        %v1996 = vpop.f32.mrf.mxu0
        %v1997 = vadd.f32 %v1901, %v1996
        %v1998 = vpop.f32.mrf.mxu0
        %1999 = vdwg.mxu0
        %v2000 = vlaneseq
        %v2001 = vand.u32 %v2000, 127
        %vm2002 = vcmp.lt.s32.totalorder %v2001, 32
        %v2003 = vsel %vm2002, %v1986, -1e+30
        %v2004 = vsel %vm2002, %v1989, -1e+30
        %v2005 = vsel %vm2002, %v1994, -1e+30
        %v2006 = vsel %vm2002, %v1997, -1e+30
        %2007 = vmax.xlane.f32.xlu0 %v2003
        %v2008 = vpop.xlane.xlu0 %2007
        %2009 = vmax.xlane.f32.xlu0 %v2004
        %v2010 = vpop.xlane.xlu0 %2009
        %2011 = vmax.xlane.f32.xlu0 %v2005
        %v2012 = vpop.xlane.xlu0 %2011
        %2013 = vmax.xlane.f32.xlu0 %v2006
        %v2014 = vpop.xlane.xlu0 %2013
        %v2015 = vsub.f32 %v2003, %v2008
        %v2016 = vsub.f32 %v2004, %v2010
        %v2017 = vsub.f32 %v2005, %v2012
        %v2018 = vsub.f32 %v2006, %v2014
        %v2019 = vmul.f32 %v2015, 1.442695
        %v2020 = vpow.pop %v2019
        %v2021 = vmul.f32 %v2016, 1.442695
        %v2022 = vpow.pop %v2021
        %v2023 = vmul.f32 %v2017, 1.442695
        %v2024 = vpow.pop %v2023
        %v2025 = vmul.f32 %v2018, 1.442695
        %v2026 = vpow.pop %v2025
        %2027 = vadd.xlane.f32.xlu0 %v2020
        %v2028 = vpop.xlane.xlu0 %2027
        %2029 = vadd.xlane.f32.xlu0 %v2022
        %v2030 = vpop.xlane.xlu0 %2029
        %2031 = vadd.xlane.f32.xlu0 %v2024
        %v2032 = vpop.xlane.xlu0 %2031
        %2033 = vadd.xlane.f32.xlu0 %v2026
        %v2034 = vpop.xlane.xlu0 %2033
        %v2035 = vrcp.pop %v2028
        %v2036 = vrcp.pop %v2030
        %v2037 = vrcp.pop %v2032
        %v2038 = vrcp.pop %v2034
        %v2039 = vmul.f32 %v2020, %v2035
        %v2040 = vmul.f32 %v2022, %v2036
        %v2041 = vmul.f32 %v2024, %v2037
        %v2042 = vmul.f32 %v2026, %v2038
        %2043 = vst [vmem:[%s640] sm:$0xff] %v2039
        %2044 = vst [vmem:[%s640 + $0x8] sm:$0xff] %v2040
        %2045 = vst [vmem:[%s640 + $0x10] sm:$0xff] %v2041
        %2046 = vst [vmem:[%s640 + $0x18] sm:$0xff] %v2042
        %s2047 = sand.u32 %s354, 1
        %s2048 = scalar_lea.sflag [#allocation4], %s2047
        %s2049 = sand.u32 %s354, 1
        %s2050 = smul.addr %s2049, 32
        %s2051 = scalar_lea.vmem [#allocation16], %s2050
        %s2052 = sand.u32 %s380, 1
        %s2053 = scalar_lea.sflag [#allocation18], %s2052
        %s2054 = sand.u32 %s380, 1
        %s2055 = smul.addr %s2054, 64
        %s2056 = scalar_lea.vmem [#allocation17], %s2055
        // Predicated region
        $region109: #{tpu_custom_call.1} parent=75 // pred_check
          %p2057 = pneg %p364
        $region110: #{tpu_custom_call.1} parent=75 // pred_check_branch
          %2059 = sbr.rel (%p2057) target = $region112
        $region111: #{tpu_custom_call.1} parent=75 // pred_region
          %s2060 = smul.u32 4, %s42
          %s2062 = ssub.s32 512, 512
          %2063 = vsyncadd %s2048, %s2062
          %s2064 = smul.addr %s2060, 128
          %s2065 = scalar_lea.hbm %s14, %s2064
          %s2066 = sshll.u32 %s2051, 4
          %s2067 = int_to_ptr.vmem [resolvable:$true] %s2066
          %2072 = dma.vmem_to_hbm [thread:$0]  %s2067, 512, %s2065, %s2048, 128, 128, 8
        $region112: #{tpu_custom_call.1} parent=75 // pred_fallthru
          _
        // Predicated region
        $region113: #{tpu_custom_call.1} parent=75 // pred_check
          %p2073 = pneg %p390
        $region114: #{tpu_custom_call.1} parent=75 // pred_check_branch
          %2075 = sbr.rel (%p2073) target = $region116
        $region115: #{tpu_custom_call.1} parent=75 // pred_region
          %s2076 = smul.u32 4, %s42
          %s2078 = ssub.s32 1024, 1024
          %2079 = vsyncadd %s2053, %s2078
          %s2080 = smul.addr %s2076, 2
          %s2081 = smul.addr %s2080, 128
          %s2082 = scalar_lea.hbm %s15, %s2081
          %s2083 = sshll.u32 %s2056, 4
          %s2084 = int_to_ptr.vmem [resolvable:$true] %s2083
          %2089 = dma.vmem_to_hbm [thread:$0]  %s2084, 1024, %s2082, %s2053, 128, 128, 8
        $region116: #{tpu_custom_call.1} parent=75 // pred_fallthru
          _
      $region76: #{tpu_custom_call.1} parent=5 // pred_fallthru
        _
      %p2090 = scmp.le.s32.totalorder 2, %s37
      // Predicated region
      $region117: #{tpu_custom_call.1} parent=5 // pred_check
        %p2091 = pneg %p2090
      $region118: #{tpu_custom_call.1} parent=5 // pred_check_branch
        %2093 = sbr.rel (%p2091) target = $region120
      $region119: #{tpu_custom_call.1} parent=5 // pred_region
        %s2094 = ssub.s32 %s37, 2
        // Predicated region
        $region121: #{tpu_custom_call.1} parent=119 // pred_check
          %p2095 = pneg %p370
        $region122: #{tpu_custom_call.1} parent=119 // pred_check_branch
          %2097 = sbr.rel (%p2095) target = $region124
        $region123: #{tpu_custom_call.1} parent=119 // pred_region
          %s2098 = sand.u32 %s355, 1
          %s2099 = scalar_lea.sflag [#allocation4], %s2098
          %s2100 = sand.u32 %s355, 1
          %s2101 = smul.addr %s2100, 32
          %s2102 = scalar_lea.vmem [#allocation16], %s2101
          %2103 = dma.done %s2099, 512
        $region124: #{tpu_custom_call.1} parent=119 // pred_fallthru
          _
        // Predicated region
        $region125: #{tpu_custom_call.1} parent=119 // pred_check
          %p2104 = pneg %p396
        $region126: #{tpu_custom_call.1} parent=119 // pred_check_branch
          %2106 = sbr.rel (%p2104) target = $region128
        $region127: #{tpu_custom_call.1} parent=119 // pred_region
          %s2107 = sand.u32 %s381, 1
          %s2108 = scalar_lea.sflag [#allocation18], %s2107
          %s2109 = sand.u32 %s381, 1
          %s2110 = smul.addr %s2109, 64
          %s2111 = scalar_lea.vmem [#allocation17], %s2110
          %2112 = dma.done %s2108, 1024
        $region128: #{tpu_custom_call.1} parent=119 // pred_fallthru
          _
      $region120: #{tpu_custom_call.1} parent=5 // pred_fallthru
        _
    $region6: #{tpu_custom_call.1} parent=1 // loop_footer
      %s41 = sadd.s32 1, %s37
    $region7: #{tpu_custom_call.1} parent=1 // loop_footer_branch
      %36 = sbr.rel target = $region3
    $region8: #{tpu_custom_call.1} parent=1 // loop_exit
      _
    %2113 = vsyncpa [#allocation3], 1
    %s2114 = scalar_lea.sflag [#allocation3], 1
    %2115 = vsyncpa %s2114, 1
    %2116 = vsyncpa [#allocation6], 1
    %2117 = vsyncpa [#allocation9], 1
    %s2118 = scalar_lea.sflag [#allocation9], 1
    %2119 = vsyncpa %s2118, 1
    %2120 = vsyncpa [#allocation12], 1
    %2121 = vsyncpa [#allocation15], 1
    %2122 = vsyncpa [#allocation4], 1
    %s2123 = scalar_lea.sflag [#allocation4], 1
    %2124 = vsyncpa %s2123, 1
    %2125 = vsyncpa [#allocation18], 1
    %s2126 = scalar_lea.sflag [#allocation18], 1
    %2127 = vsyncpa %s2126, 1

</llo_original>
